<compile_context>
chip_gen: v6e
topology: v6e:2x2x1
jax: 0.10.0
libtpu: 0.0.40
codegen_flags: <defaults>
</compile_context>

<pallas_src>
import functools

import jax
import jax.numpy as jnp
import numpy as np
from jax.experimental import pallas as pl
from jax.experimental.pallas import tpu as pltpu

K = 5            # Conv1d kernel_size in the reference module
BN_EPS = 1e-5    # nn.BatchNorm1d default eps


def _shift_up(x, k):
    """y[r] = x[(r + k) % R] along the sublane (row) axis; k is a static Python int."""
    if k == 0:
        return x
    return pltpu.roll(x, shift=x.shape[0] - k, axis=0)


def _tree_sum(vals):
    """Balanced-tree sum of a Python list of arrays (shorter accumulate chain than a fold)."""
    while len(vals) > 1:
        nxt = [vals[i] + vals[i + 1] for i in range(0, len(vals) - 1, 2)]
        if len(vals) % 2:
            nxt.append(vals[-1])
        vals = nxt
    return vals[0]


def dqn_kernel(x_ref,
               w1_ref, g1_ref, be1_ref,
               w2_ref, g2_ref, be2_ref,
               w3_ref, g3_ref, be3_ref,
               hw_ref, hb_ref,
               out_ref, *, blk):
    rows = x_ref.shape[0]
    n_batch = rows // blk
    n_pad = out_ref.shape[0]

    # Per-row position l within its sample, generated in-kernel (no extra input / DMA).
    r_idx = jax.lax.broadcasted_iota(jnp.int32, (rows, 1), 0)
    if (blk & (blk - 1)) == 0:                      # blk is a power of two -> cheap mask
        lpos = r_idx & (blk - 1)
    else:
        lpos = jax.lax.rem(r_idx, jnp.int32(blk))

    def bn_relu(acc, l_out, g_ref, be_ref):
        """PyTorch training-mode BatchNorm1d (biased var over N*l_out valid rows) + affine + ReLU,
        via masked sum / sum-of-squares and a single folded scale/shift pass."""
        validf = (lpos < l_out).astype(jnp.float32)                    # (rows, 1)
        am = acc * validf
        inv_n = 1.0 / float(n_batch * l_out)
        mean = jnp.sum(am, axis=0, keepdims=True) * inv_n              # (1, Cout)
        ex2 = jnp.sum(am * acc, axis=0, keepdims=True) * inv_n         # E[x^2] over valid rows
        scale = jax.lax.rsqrt(ex2 - mean * mean + BN_EPS) * g_ref[...]
        shift = be_ref[...] - mean * scale                             # conv bias cancelled by BN
        return jnp.maximum(acc * scale + shift, 0.0)

    # ---- layer 1: Cin = nHist (tiny) -> per-tap matmuls, tree-summed --------------------------
    x0 = x_ref[...]
    l1 = blk - (K - 1)
    taps = [jnp.dot(_shift_up(x0, k), w1_ref[k], preferred_element_type=jnp.float32)
            for k in range(K)]
    x = bn_relu(_tree_sum(taps), l1, g1_ref, be1_ref)

    # ---- layers 2,3: lane-stack the K sublane-shifted copies -> ONE MXU push per layer --------
    def conv_stacked(x, l_in, w_ref, g_ref, be_ref):
        l_out = l_in - (K - 1)
        xk = jnp.concatenate([_shift_up(x, k) for k in range(K)], axis=1)   # (rows, K*Cin)
        acc = jnp.dot(xk, w_ref[...], preferred_element_type=jnp.float32)
        return bn_relu(acc, l_out, g_ref, be_ref), l_out

    x, l2 = conv_stacked(x, l1, w2_ref, g2_ref, be2_ref)
    x, l3 = conv_stacked(x, l2, w3_ref, g3_ref, be3_ref)

    # ---- Linear head, compacted in-kernel ------------------------------------------------------
    # Lane-stack the l3 positions (row r, lanes l*32+c hold x[r+l, c]); select the N sample rows
    # (r = n*blk) with a tiny one-hot matmul; then one push against the stacked head weight.
    if l3 > 1:
        xh = jnp.concatenate([_shift_up(x, li) for li in range(l3)], axis=1)  # (rows, l3*32)
    else:
        xh = x
    sel = (jax.lax.broadcasted_iota(jnp.int32, (n_pad, rows), 1)
           == blk * jax.lax.broadcasted_iota(jnp.int32, (n_pad, rows), 0)
           ).astype(jnp.float32)                                              # sel[n, n*blk] = 1
    xsel = jnp.dot(sel, xh, preferred_element_type=jnp.float32)               # (n_pad, l3*32)
    out_ref[...] = (jnp.dot(xsel, hw_ref[...], preferred_element_type=jnp.float32)
                    + hb_ref[...])                                            # (n_pad, 128) store


def dqn_forward(x_ncw, kparams, n_output):
    """x_ncw: (N, nHist, nFeat) like the PyTorch module.  Returns (N, n_output) f32."""
    n, n_hist, n_feat = x_ncw.shape
    blk = n_feat
    rows = n * blk
    n_pad = -(-n // 8) * 8                      # compacted output rows, sublane-aligned
    out_pad = kparams[-1].shape[-1]

    # (N, C, L) -> (N*L, C): channels on the lane axis, fixed per-sample row stride = blk.
    x2d = jnp.transpose(x_ncw, (0, 2, 1)).reshape(rows, n_hist).astype(jnp.float32)
    inputs = (x2d,) + tuple(kparams)

    # --- honest VMEM footprint: every slab is padded to (8, 128) tiles in VMEM ---
    def rup(a, m):
        return -(-a // m) * m

    def slab_bytes(shape, itemsize=4):
        if len(shape) == 1:
            lead, r, c = 1, 1, shape[0]
        else:
            lead = int(np.prod(shape[:-2], dtype=np.int64)) if len(shape) > 2 else 1
            r, c = shape[-2], shape[-1]
        return lead * rup(r, 8) * rup(c, 128) * itemsize

    operand_bytes = sum(slab_bytes(a.shape, a.dtype.itemsize) for a in inputs)
    operand_bytes += slab_bytes((n_pad, out_pad))
    # Widest in-kernel slab is the tap/head lane-stack (<= 256 padded lanes); allow ~6
    # concurrently-live full-height f32 slabs for activations / stacks / temporaries.
    interm_bytes = 6 * rup(rows, 8) * 256 * 4
    est_bytes = operand_bytes + interm_bytes

    try:
        vmem_cap = int(getattr(pltpu.get_tpu_info(), "vmem_capacity_bytes", 64 * 1024 * 1024))
    except Exception:
        vmem_cap = 64 * 1024 * 1024             # assume the smallest generation (v7x: 64 MiB)
    vmem_limit = int(vmem_cap * 0.9)

    assert est_bytes <= vmem_limit, (
        f"batch too large for whole-batch-in-VMEM DQN kernel: ~{est_bytes} B needed vs "
        f"{vmem_limit} B scoped VMEM; use a batch-blocked two-pass-BN variant")
    # TODO(synk): batch-blocked grid + two-pass BN for batches beyond the VMEM budget / megacore.

    vmem_spec = pl.BlockSpec(memory_space=pltpu.MemorySpace.VMEM)
    out2d = pl.pallas_call(
        functools.partial(dqn_kernel, blk=blk),
        out_shape=jax.ShapeDtypeStruct((n_pad, out_pad), jnp.float32),
        in_specs=[vmem_spec] * len(inputs),
        out_specs=vmem_spec,
        compiler_params=pltpu.CompilerParams(vmem_limit_bytes=vmem_limit),
    )(*inputs)

    # Row n holds sample n's logits; first n_output lanes are the real actions.
    return out2d[:n, :n_output]


def make_torch_params(key, n_hist, n_feat, n_output):
    """Deterministic synthetic parameters in PyTorch's native layouts."""
    def c1d(size):
        return (size - (K - 1) - 1) // 1 + 1
    conv_l = c1d(c1d(c1d(n_feat)))
    lin_in = conv_l * 32

    ks = jax.random.split(key, 14)
    w1 = jax.random.normal(ks[0], (16, n_hist, K), jnp.float32) * 0.2     # (Cout, Cin, K)
    b1 = jax.random.normal(ks[1], (16,), jnp.float32) * 0.1
    w2 = jax.random.normal(ks[2], (32, 16, K), jnp.float32) * 0.1
    b2 = jax.random.normal(ks[3], (32,), jnp.float32) * 0.1
    w3 = jax.random.normal(ks[4], (32, 32, K), jnp.float32) * 0.1
    b3 = jax.random.normal(ks[5], (32,), jnp.float32) * 0.1
    g1 = 1.0 + 0.1 * jax.random.normal(ks[6], (16,), jnp.float32)
    be1 = 0.1 * jax.random.normal(ks[7], (16,), jnp.float32)
    g2 = 1.0 + 0.1 * jax.random.normal(ks[8], (32,), jnp.float32)
    be2 = 0.1 * jax.random.normal(ks[9], (32,), jnp.float32)
    g3 = 1.0 + 0.1 * jax.random.normal(ks[10], (32,), jnp.float32)
    be3 = 0.1 * jax.random.normal(ks[11], (32,), jnp.float32)
    hw = jax.random.normal(ks[12], (n_output, lin_in), jnp.float32) * 0.1  # (nOut, 32*L3)
    hb = jax.random.normal(ks[13], (n_output,), jnp.float32) * 0.1
    return (w1, b1, g1, be1, w2, b2, g2, be2, w3, b3, g3, be3, hw, hb), conv_l


def pack_params(torch_params, conv_l, n_output, out_pad=128):
    """Re-lay-out PyTorch parameters for the kernel (conv biases dropped: BN cancels them)."""
    (w1, _b1, g1, be1, w2, _b2, g2, be2, w3, _b3, g3, be3, hw, hb) = torch_params

    def conv_w_pertap(w):     # (Cout, Cin, K) -> (K, Cin, Cout): per-tap matmul slabs (layer 1)
        return jnp.transpose(w, (2, 1, 0))

    def conv_w_stacked(w):    # (Cout, Cin, K) -> (K*Cin, Cout): row index = k*Cin + ci
        cout, cin, k = w.shape
        return jnp.transpose(w, (2, 1, 0)).reshape(k * cin, cout)

    def vec(v):               # (C,) -> (1, C)
        return v.reshape(1, -1)

    # Head: PyTorch flattens (N, 32, L3) channel-major (index = c*L3 + l).  The kernel's
    # lane-stacked head input is position-major (index = l*32 + c), so permute to
    # (L3, 32, nOut) -> (L3*32, nOut) and zero-pad output lanes to 128 for a lane-dense store.
    hw_k = jnp.transpose(hw.reshape(n_output, 32, conv_l), (2, 1, 0)).reshape(conv_l * 32,
                                                                              n_output)
    hw_pad = jnp.zeros((conv_l * 32, out_pad), jnp.float32).at[:, :n_output].set(hw_k)
    hb_pad = jnp.zeros((1, out_pad), jnp.float32).at[0, :n_output].set(hb)

    return (conv_w_pertap(w1), vec(g1), vec(be1),
            conv_w_stacked(w2), vec(g2), vec(be2),
            conv_w_stacked(w3), vec(g3), vec(be3),
            hw_pad, hb_pad)


def dqn_reference(x_ncw, torch_params):
    """Pure-JAX reference in PyTorch layouts (uses the conv biases the kernel drops)."""
    (w1, b1, g1, be1, w2, b2, g2, be2, w3, b3, g3, be3, hw, hb) = torch_params

    def conv1d(x, w, b):
        y = jax.lax.conv_general_dilated(x, w, window_strides=(1,), padding='VALID',
                                         dimension_numbers=('NCH', 'OIH', 'NCH'))
        return y + b[None, :, None]

    def bn_relu(x, g, be):   # training-mode BatchNorm1d: biased variance over (N, L)
        mean = jnp.mean(x, axis=(0, 2), keepdims=True)
        var = jnp.mean((x - mean) ** 2, axis=(0, 2), keepdims=True)
        y = (x - mean) / jnp.sqrt(var + BN_EPS) * g[None, :, None] + be[None, :, None]
        return jnp.maximum(y, 0.0)

    x = bn_relu(conv1d(x_ncw, w1, b1), g1, be1)
    x = bn_relu(conv1d(x, w2, b2), g2, be2)
    x = bn_relu(conv1d(x, w3, b3), g3, be3)
    flat = x.reshape(x.shape[0], -1)          # channel-major flatten, like torch .view
    return flat @ hw.T + hb


if __name__ == "__main__":
    # Shapes consistent with the module: nHist=4 input channels, nFeat=16 positions,
    # nOutput=8 actions, batch=2.  (PyTorch input would be x: (2, 4, 16) NCW.)
    N, nHist, nFeat, nOutput = 2, 4, 16, 8

    key = jax.random.PRNGKey(0)
    k_x, k_p = jax.random.split(key)
    x = jax.random.normal(k_x, (N, nHist, nFeat), jnp.float32)

    torch_params, conv_l = make_torch_params(k_p, nHist, nFeat, nOutput)
    kparams = pack_params(torch_params, conv_l, nOutput)

    out = dqn_forward(x, kparams, nOutput)
    out = jax.block_until_ready(out)

    ref = dqn_reference(x, torch_params)
    np.testing.assert_allclose(np.asarray(out), np.asarray(ref), rtol=1e-4, atol=1e-4)

    print("KERNEL_OK")
</pallas_src>

<mosaic_0001>
module attributes {stable_mosaic.version = 11 : i64} {
  func.func @dqn_kernel(%arg0: memref<32x4xf32, #tpu.memory_space<vmem>>, %arg1: memref<5x4x16xf32, #tpu.memory_space<vmem>>, %arg2: memref<1x16xf32, #tpu.memory_space<vmem>>, %arg3: memref<1x16xf32, #tpu.memory_space<vmem>>, %arg4: memref<80x32xf32, #tpu.memory_space<vmem>>, %arg5: memref<1x32xf32, #tpu.memory_space<vmem>>, %arg6: memref<1x32xf32, #tpu.memory_space<vmem>>, %arg7: memref<160x32xf32, #tpu.memory_space<vmem>>, %arg8: memref<1x32xf32, #tpu.memory_space<vmem>>, %arg9: memref<1x32xf32, #tpu.memory_space<vmem>>, %arg10: memref<128x128xf32, #tpu.memory_space<vmem>>, %arg11: memref<1x128xf32, #tpu.memory_space<vmem>>, %arg12: memref<8x128xf32, #tpu.memory_space<vmem>>) attributes {dimension_semantics = [], scalar_prefetch = 0 : i64, scratch_operands = 0 : i64, tpu.core_type = #tpu.core_type<tc>} {
    %0 = tpu.iota {dimensions = array<i32: 0>} : vector<32x1xi32>
    %c15_i32 = arith.constant 15 : i32
    %1 = vector.broadcast %c15_i32 : i32 to vector<32x1xi32>
    %2 = arith.andi %0, %1 : vector<32x1xi32>
    %c0 = arith.constant 0 : index
    %c0_0 = arith.constant 0 : index
    %3 = vector.load %arg0[%c0, %c0_0] : memref<32x4xf32, #tpu.memory_space<vmem>>, vector<32x4xf32>
    %c0_1 = arith.constant 0 : index
    %c0_2 = arith.constant 0 : index
    %c0_3 = arith.constant 0 : index
    %4 = vector.load %arg1[%c0_1, %c0_2, %c0_3] : memref<5x4x16xf32, #tpu.memory_space<vmem>>, vector<1x4x16xf32>
    %5 = vector.shape_cast %4 : vector<1x4x16xf32> to vector<4x16xf32>
    %cst = arith.constant dense<0.000000e+00> : vector<32x16xf32>
    %6 = tpu.matmul %3, %5, %cst {dimension_numbers = #tpu.dot_dimension_numbers<[1], [0], [0], [1], [0, 0, 1, 1], [], []>} : vector<32x4xf32>, vector<4x16xf32>, vector<32x16xf32> -> vector<32x16xf32>
    %c31_i32 = arith.constant 31 : i32
    %7 = tpu.dynamic_rotate %3 by %c31_i32 dim 0 : vector<32x4xf32>, i32 -> vector<32x4xf32>
    %c1 = arith.constant 1 : index
    %c0_4 = arith.constant 0 : index
    %c0_5 = arith.constant 0 : index
    %8 = vector.load %arg1[%c1, %c0_4, %c0_5] : memref<5x4x16xf32, #tpu.memory_space<vmem>>, vector<1x4x16xf32>
    %9 = vector.shape_cast %8 : vector<1x4x16xf32> to vector<4x16xf32>
    %cst_6 = arith.constant dense<0.000000e+00> : vector<32x16xf32>
    %10 = tpu.matmul %7, %9, %cst_6 {dimension_numbers = #tpu.dot_dimension_numbers<[1], [0], [0], [1], [0, 0, 1, 1], [], []>} : vector<32x4xf32>, vector<4x16xf32>, vector<32x16xf32> -> vector<32x16xf32>
    %c30_i32 = arith.constant 30 : i32
    %11 = tpu.dynamic_rotate %3 by %c30_i32 dim 0 : vector<32x4xf32>, i32 -> vector<32x4xf32>
    %c2 = arith.constant 2 : index
    %c0_7 = arith.constant 0 : index
    %c0_8 = arith.constant 0 : index
    %12 = vector.load %arg1[%c2, %c0_7, %c0_8] : memref<5x4x16xf32, #tpu.memory_space<vmem>>, vector<1x4x16xf32>
    %13 = vector.shape_cast %12 : vector<1x4x16xf32> to vector<4x16xf32>
    %cst_9 = arith.constant dense<0.000000e+00> : vector<32x16xf32>
    %14 = tpu.matmul %11, %13, %cst_9 {dimension_numbers = #tpu.dot_dimension_numbers<[1], [0], [0], [1], [0, 0, 1, 1], [], []>} : vector<32x4xf32>, vector<4x16xf32>, vector<32x16xf32> -> vector<32x16xf32>
    %c29_i32 = arith.constant 29 : i32
    %15 = tpu.dynamic_rotate %3 by %c29_i32 dim 0 : vector<32x4xf32>, i32 -> vector<32x4xf32>
    %c3 = arith.constant 3 : index
    %c0_10 = arith.constant 0 : index
    %c0_11 = arith.constant 0 : index
    %16 = vector.load %arg1[%c3, %c0_10, %c0_11] : memref<5x4x16xf32, #tpu.memory_space<vmem>>, vector<1x4x16xf32>
    %17 = vector.shape_cast %16 : vector<1x4x16xf32> to vector<4x16xf32>
    %cst_12 = arith.constant dense<0.000000e+00> : vector<32x16xf32>
    %18 = tpu.matmul %15, %17, %cst_12 {dimension_numbers = #tpu.dot_dimension_numbers<[1], [0], [0], [1], [0, 0, 1, 1], [], []>} : vector<32x4xf32>, vector<4x16xf32>, vector<32x16xf32> -> vector<32x16xf32>
    %c28_i32 = arith.constant 28 : i32
    %19 = tpu.dynamic_rotate %3 by %c28_i32 dim 0 : vector<32x4xf32>, i32 -> vector<32x4xf32>
    %c4 = arith.constant 4 : index
    %c0_13 = arith.constant 0 : index
    %c0_14 = arith.constant 0 : index
    %20 = vector.load %arg1[%c4, %c0_13, %c0_14] : memref<5x4x16xf32, #tpu.memory_space<vmem>>, vector<1x4x16xf32>
    %21 = vector.shape_cast %20 : vector<1x4x16xf32> to vector<4x16xf32>
    %cst_15 = arith.constant dense<0.000000e+00> : vector<32x16xf32>
    %22 = tpu.matmul %19, %21, %cst_15 {dimension_numbers = #tpu.dot_dimension_numbers<[1], [0], [0], [1], [0, 0, 1, 1], [], []>} : vector<32x4xf32>, vector<4x16xf32>, vector<32x16xf32> -> vector<32x16xf32>
    %23 = arith.addf %6, %10 : vector<32x16xf32>
    %24 = arith.addf %14, %18 : vector<32x16xf32>
    %25 = arith.addf %23, %24 : vector<32x16xf32>
    %26 = arith.addf %25, %22 : vector<32x16xf32>
    %c12_i32 = arith.constant 12 : i32
    %27 = vector.broadcast %c12_i32 : i32 to vector<32x1xi32>
    %28 = arith.cmpi slt, %2, %27 : vector<32x1xi32>
    %29 = arith.extui %28 : vector<32x1xi1> to vector<32x1xi32>
    %30 = arith.sitofp %29 : vector<32x1xi32> to vector<32x1xf32>
    %31 = vector.broadcast %30 : vector<32x1xf32> to vector<32x16xf32>
    %32 = arith.mulf %26, %31 : vector<32x16xf32>
    %cst_16 = arith.constant dense<0.000000e+00> : vector<16xf32>
    %33 = vector.multi_reduction <add>, %32, %cst_16 [0] : vector<32x16xf32> to vector<16xf32>
    %34 = vector.shape_cast %33 : vector<16xf32> to vector<1x16xf32>
    %cst_17 = arith.constant 0.0416666679 : f32
    %35 = vector.broadcast %cst_17 : f32 to vector<1x16xf32>
    %36 = arith.mulf %34, %35 : vector<1x16xf32>
    %37 = arith.mulf %32, %26 : vector<32x16xf32>
    %cst_18 = arith.constant dense<0.000000e+00> : vector<16xf32>
    %38 = vector.multi_reduction <add>, %37, %cst_18 [0] : vector<32x16xf32> to vector<16xf32>
    %39 = vector.shape_cast %38 : vector<16xf32> to vector<1x16xf32>
    %cst_19 = arith.constant 0.0416666679 : f32
    %40 = vector.broadcast %cst_19 : f32 to vector<1x16xf32>
    %41 = arith.mulf %39, %40 : vector<1x16xf32>
    %42 = arith.mulf %36, %36 : vector<1x16xf32>
    %43 = arith.subf %41, %42 : vector<1x16xf32>
    %cst_20 = arith.constant 9.99999974E-6 : f32
    %44 = vector.broadcast %cst_20 : f32 to vector<1x16xf32>
    %45 = arith.addf %43, %44 : vector<1x16xf32>
    %46 = math.rsqrt %45 : vector<1x16xf32>
    %c0_21 = arith.constant 0 : index
    %c0_22 = arith.constant 0 : index
    %47 = vector.load %arg2[%c0_21, %c0_22] : memref<1x16xf32, #tpu.memory_space<vmem>>, vector<1x16xf32>
    %48 = arith.mulf %46, %47 : vector<1x16xf32>
    %c0_23 = arith.constant 0 : index
    %c0_24 = arith.constant 0 : index
    %49 = vector.load %arg3[%c0_23, %c0_24] : memref<1x16xf32, #tpu.memory_space<vmem>>, vector<1x16xf32>
    %50 = arith.mulf %36, %48 : vector<1x16xf32>
    %51 = arith.subf %49, %50 : vector<1x16xf32>
    %52 = vector.broadcast %48 : vector<1x16xf32> to vector<32x16xf32>
    %53 = arith.mulf %26, %52 : vector<32x16xf32>
    %54 = vector.broadcast %51 : vector<1x16xf32> to vector<32x16xf32>
    %55 = arith.addf %53, %54 : vector<32x16xf32>
    %cst_25 = arith.constant 0.000000e+00 : f32
    %56 = vector.broadcast %cst_25 : f32 to vector<32x16xf32>
    %57 = arith.maximumf %55, %56 : vector<32x16xf32>
    %c31_i32_26 = arith.constant 31 : i32
    %58 = tpu.dynamic_rotate %57 by %c31_i32_26 dim 0 : vector<32x16xf32>, i32 -> vector<32x16xf32>
    %c30_i32_27 = arith.constant 30 : i32
    %59 = tpu.dynamic_rotate %57 by %c30_i32_27 dim 0 : vector<32x16xf32>, i32 -> vector<32x16xf32>
    %c29_i32_28 = arith.constant 29 : i32
    %60 = tpu.dynamic_rotate %57 by %c29_i32_28 dim 0 : vector<32x16xf32>, i32 -> vector<32x16xf32>
    %c28_i32_29 = arith.constant 28 : i32
    %61 = tpu.dynamic_rotate %57 by %c28_i32_29 dim 0 : vector<32x16xf32>, i32 -> vector<32x16xf32>
    %62 = tpu.concatenate %57, %58, %59, %60, %61 in 1 : vector<32x16xf32>, vector<32x16xf32>, vector<32x16xf32>, vector<32x16xf32>, vector<32x16xf32> -> vector<32x80xf32>
    %c0_30 = arith.constant 0 : index
    %c0_31 = arith.constant 0 : index
    %63 = vector.load %arg4[%c0_30, %c0_31] : memref<80x32xf32, #tpu.memory_space<vmem>>, vector<80x32xf32>
    %cst_32 = arith.constant dense<0.000000e+00> : vector<32x32xf32>
    %64 = tpu.matmul %62, %63, %cst_32 {dimension_numbers = #tpu.dot_dimension_numbers<[1], [0], [0], [1], [0, 0, 1, 1], [], []>} : vector<32x80xf32>, vector<80x32xf32>, vector<32x32xf32> -> vector<32x32xf32>
    %c8_i32 = arith.constant 8 : i32
    %65 = vector.broadcast %c8_i32 : i32 to vector<32x1xi32>
    %66 = arith.cmpi slt, %2, %65 : vector<32x1xi32>
    %67 = arith.extui %66 : vector<32x1xi1> to vector<32x1xi32>
    %68 = arith.sitofp %67 : vector<32x1xi32> to vector<32x1xf32>
    %69 = vector.broadcast %68 : vector<32x1xf32> to vector<32x32xf32>
    %70 = arith.mulf %64, %69 : vector<32x32xf32>
    %cst_33 = arith.constant dense<0.000000e+00> : vector<32xf32>
    %71 = vector.multi_reduction <add>, %70, %cst_33 [0] : vector<32x32xf32> to vector<32xf32>
    %72 = vector.shape_cast %71 : vector<32xf32> to vector<1x32xf32>
    %cst_34 = arith.constant 6.250000e-02 : f32
    %73 = vector.broadcast %cst_34 : f32 to vector<1x32xf32>
    %74 = arith.mulf %72, %73 : vector<1x32xf32>
    %75 = arith.mulf %70, %64 : vector<32x32xf32>
    %cst_35 = arith.constant dense<0.000000e+00> : vector<32xf32>
    %76 = vector.multi_reduction <add>, %75, %cst_35 [0] : vector<32x32xf32> to vector<32xf32>
    %77 = vector.shape_cast %76 : vector<32xf32> to vector<1x32xf32>
    %cst_36 = arith.constant 6.250000e-02 : f32
    %78 = vector.broadcast %cst_36 : f32 to vector<1x32xf32>
    %79 = arith.mulf %77, %78 : vector<1x32xf32>
    %80 = arith.mulf %74, %74 : vector<1x32xf32>
    %81 = arith.subf %79, %80 : vector<1x32xf32>
    %cst_37 = arith.constant 9.99999974E-6 : f32
    %82 = vector.broadcast %cst_37 : f32 to vector<1x32xf32>
    %83 = arith.addf %81, %82 : vector<1x32xf32>
    %84 = math.rsqrt %83 : vector<1x32xf32>
    %c0_38 = arith.constant 0 : index
    %c0_39 = arith.constant 0 : index
    %85 = vector.load %arg5[%c0_38, %c0_39] : memref<1x32xf32, #tpu.memory_space<vmem>>, vector<1x32xf32>
    %86 = arith.mulf %84, %85 : vector<1x32xf32>
    %c0_40 = arith.constant 0 : index
    %c0_41 = arith.constant 0 : index
    %87 = vector.load %arg6[%c0_40, %c0_41] : memref<1x32xf32, #tpu.memory_space<vmem>>, vector<1x32xf32>
    %88 = arith.mulf %74, %86 : vector<1x32xf32>
    %89 = arith.subf %87, %88 : vector<1x32xf32>
    %90 = vector.broadcast %86 : vector<1x32xf32> to vector<32x32xf32>
    %91 = arith.mulf %64, %90 : vector<32x32xf32>
    %92 = vector.broadcast %89 : vector<1x32xf32> to vector<32x32xf32>
    %93 = arith.addf %91, %92 : vector<32x32xf32>
    %cst_42 = arith.constant 0.000000e+00 : f32
    %94 = vector.broadcast %cst_42 : f32 to vector<32x32xf32>
    %95 = arith.maximumf %93, %94 : vector<32x32xf32>
    %c31_i32_43 = arith.constant 31 : i32
    %96 = tpu.dynamic_rotate %95 by %c31_i32_43 dim 0 : vector<32x32xf32>, i32 -> vector<32x32xf32>
    %c30_i32_44 = arith.constant 30 : i32
    %97 = tpu.dynamic_rotate %95 by %c30_i32_44 dim 0 : vector<32x32xf32>, i32 -> vector<32x32xf32>
    %c29_i32_45 = arith.constant 29 : i32
    %98 = tpu.dynamic_rotate %95 by %c29_i32_45 dim 0 : vector<32x32xf32>, i32 -> vector<32x32xf32>
    %c28_i32_46 = arith.constant 28 : i32
    %99 = tpu.dynamic_rotate %95 by %c28_i32_46 dim 0 : vector<32x32xf32>, i32 -> vector<32x32xf32>
    %100 = tpu.concatenate %95, %96, %97, %98, %99 in 1 : vector<32x32xf32>, vector<32x32xf32>, vector<32x32xf32>, vector<32x32xf32>, vector<32x32xf32> -> vector<32x160xf32>
    %c0_47 = arith.constant 0 : index
    %c0_48 = arith.constant 0 : index
    %101 = vector.load %arg7[%c0_47, %c0_48] : memref<160x32xf32, #tpu.memory_space<vmem>>, vector<160x32xf32>
    %cst_49 = arith.constant dense<0.000000e+00> : vector<32x32xf32>
    %102 = tpu.matmul %100, %101, %cst_49 {dimension_numbers = #tpu.dot_dimension_numbers<[1], [0], [0], [1], [0, 0, 1, 1], [], []>} : vector<32x160xf32>, vector<160x32xf32>, vector<32x32xf32> -> vector<32x32xf32>
    %c4_i32 = arith.constant 4 : i32
    %103 = vector.broadcast %c4_i32 : i32 to vector<32x1xi32>
    %104 = arith.cmpi slt, %2, %103 : vector<32x1xi32>
    %105 = arith.extui %104 : vector<32x1xi1> to vector<32x1xi32>
    %106 = arith.sitofp %105 : vector<32x1xi32> to vector<32x1xf32>
    %107 = vector.broadcast %106 : vector<32x1xf32> to vector<32x32xf32>
    %108 = arith.mulf %102, %107 : vector<32x32xf32>
    %cst_50 = arith.constant dense<0.000000e+00> : vector<32xf32>
    %109 = vector.multi_reduction <add>, %108, %cst_50 [0] : vector<32x32xf32> to vector<32xf32>
    %110 = vector.shape_cast %109 : vector<32xf32> to vector<1x32xf32>
    %cst_51 = arith.constant 1.250000e-01 : f32
    %111 = vector.broadcast %cst_51 : f32 to vector<1x32xf32>
    %112 = arith.mulf %110, %111 : vector<1x32xf32>
    %113 = arith.mulf %108, %102 : vector<32x32xf32>
    %cst_52 = arith.constant dense<0.000000e+00> : vector<32xf32>
    %114 = vector.multi_reduction <add>, %113, %cst_52 [0] : vector<32x32xf32> to vector<32xf32>
    %115 = vector.shape_cast %114 : vector<32xf32> to vector<1x32xf32>
    %cst_53 = arith.constant 1.250000e-01 : f32
    %116 = vector.broadcast %cst_53 : f32 to vector<1x32xf32>
    %117 = arith.mulf %115, %116 : vector<1x32xf32>
    %118 = arith.mulf %112, %112 : vector<1x32xf32>
    %119 = arith.subf %117, %118 : vector<1x32xf32>
    %cst_54 = arith.constant 9.99999974E-6 : f32
    %120 = vector.broadcast %cst_54 : f32 to vector<1x32xf32>
    %121 = arith.addf %119, %120 : vector<1x32xf32>
    %122 = math.rsqrt %121 : vector<1x32xf32>
    %c0_55 = arith.constant 0 : index
    %c0_56 = arith.constant 0 : index
    %123 = vector.load %arg8[%c0_55, %c0_56] : memref<1x32xf32, #tpu.memory_space<vmem>>, vector<1x32xf32>
    %124 = arith.mulf %122, %123 : vector<1x32xf32>
    %c0_57 = arith.constant 0 : index
    %c0_58 = arith.constant 0 : index
    %125 = vector.load %arg9[%c0_57, %c0_58] : memref<1x32xf32, #tpu.memory_space<vmem>>, vector<1x32xf32>
    %126 = arith.mulf %112, %124 : vector<1x32xf32>
    %127 = arith.subf %125, %126 : vector<1x32xf32>
    %128 = vector.broadcast %124 : vector<1x32xf32> to vector<32x32xf32>
    %129 = arith.mulf %102, %128 : vector<32x32xf32>
    %130 = vector.broadcast %127 : vector<1x32xf32> to vector<32x32xf32>
    %131 = arith.addf %129, %130 : vector<32x32xf32>
    %cst_59 = arith.constant 0.000000e+00 : f32
    %132 = vector.broadcast %cst_59 : f32 to vector<32x32xf32>
    %133 = arith.maximumf %131, %132 : vector<32x32xf32>
    %c31_i32_60 = arith.constant 31 : i32
    %134 = tpu.dynamic_rotate %133 by %c31_i32_60 dim 0 : vector<32x32xf32>, i32 -> vector<32x32xf32>
    %c30_i32_61 = arith.constant 30 : i32
    %135 = tpu.dynamic_rotate %133 by %c30_i32_61 dim 0 : vector<32x32xf32>, i32 -> vector<32x32xf32>
    %c29_i32_62 = arith.constant 29 : i32
    %136 = tpu.dynamic_rotate %133 by %c29_i32_62 dim 0 : vector<32x32xf32>, i32 -> vector<32x32xf32>
    %137 = tpu.concatenate %133, %134, %135, %136 in 1 : vector<32x32xf32>, vector<32x32xf32>, vector<32x32xf32>, vector<32x32xf32> -> vector<32x128xf32>
    %138 = tpu.iota {dimensions = array<i32: 1>} : vector<8x32xi32>
    %139 = tpu.iota {dimensions = array<i32: 0>} : vector<8x32xi32>
    %c16_i32 = arith.constant 16 : i32
    %140 = vector.broadcast %c16_i32 : i32 to vector<8x32xi32>
    %141 = arith.muli %140, %139 : vector<8x32xi32>
    %142 = arith.cmpi eq, %138, %141 : vector<8x32xi32>
    %143 = arith.extui %142 : vector<8x32xi1> to vector<8x32xi32>
    %144 = arith.sitofp %143 : vector<8x32xi32> to vector<8x32xf32>
    %cst_63 = arith.constant dense<0.000000e+00> : vector<8x128xf32>
    %145 = tpu.matmul %144, %137, %cst_63 {dimension_numbers = #tpu.dot_dimension_numbers<[1], [0], [0], [1], [0, 0, 1, 1], [], []>} : vector<8x32xf32>, vector<32x128xf32>, vector<8x128xf32> -> vector<8x128xf32>
    %c0_64 = arith.constant 0 : index
    %c0_65 = arith.constant 0 : index
    %146 = vector.load %arg10[%c0_64, %c0_65] : memref<128x128xf32, #tpu.memory_space<vmem>>, vector<128x128xf32>
    %cst_66 = arith.constant dense<0.000000e+00> : vector<8x128xf32>
    %147 = tpu.matmul %145, %146, %cst_66 {dimension_numbers = #tpu.dot_dimension_numbers<[1], [0], [0], [1], [0, 0, 1, 1], [], []>} : vector<8x128xf32>, vector<128x128xf32>, vector<8x128xf32> -> vector<8x128xf32>
    %c0_67 = arith.constant 0 : index
    %c0_68 = arith.constant 0 : index
    %148 = vector.load %arg11[%c0_67, %c0_68] : memref<1x128xf32, #tpu.memory_space<vmem>>, vector<1x128xf32>
    %149 = vector.broadcast %148 : vector<1x128xf32> to vector<8x128xf32>
    %150 = arith.addf %147, %149 : vector<8x128xf32>
    %c0_69 = arith.constant 0 : index
    %c0_70 = arith.constant 0 : index
    %151 = vector.load %arg12[%c0_69, %c0_70] : memref<8x128xf32, #tpu.memory_space<vmem>>, vector<8x128xf32>
    tpu.vector_store %arg12[%c0_69, %c0_70], %150 {strides = array<i32>} : memref<8x128xf32, #tpu.memory_space<vmem>>, vector<8x128xf32>,
    return
  }
}

</mosaic_0001>

<llo_original>
// kernel: tpu_custom_call.1
$region0: #{tpu_custom_call.1}
  #allocation0 [shape = 'u32[]', space=smem, size = 0x4, offset = 0x4, fixed_abs, tag = 'smem constant byte address 0x4 - core index']
  #allocation1 [shape = 'u32[144,128]{1,0:T(1,128)}', space=vmem, size = 0x12000, scoped, tag = 'internal scratch']
  %s0 = inlined_call_operand.vmem [shape: f32[32,4], index: 0, kind: input, shape index: {}]
  %s1 = inlined_call_operand.vmem [shape: f32[5,4,16], index: 1, kind: input, shape index: {}]
  %s2 = inlined_call_operand.vmem [shape: f32[1,16], index: 2, kind: input, shape index: {}]
  %s3 = inlined_call_operand.vmem [shape: f32[1,16], index: 3, kind: input, shape index: {}]
  %s4 = inlined_call_operand.vmem [shape: f32[80,32], index: 4, kind: input, shape index: {}]
  %s5 = inlined_call_operand.vmem [shape: f32[1,32], index: 5, kind: input, shape index: {}]
  %s6 = inlined_call_operand.vmem [shape: f32[1,32], index: 6, kind: input, shape index: {}]
  %s7 = inlined_call_operand.vmem [shape: f32[160,32], index: 7, kind: input, shape index: {}]
  %s8 = inlined_call_operand.vmem [shape: f32[1,32], index: 8, kind: input, shape index: {}]
  %s9 = inlined_call_operand.vmem [shape: f32[1,32], index: 9, kind: input, shape index: {}]
  %s10 = inlined_call_operand.vmem [shape: f32[128,128], index: 10, kind: input, shape index: {}]
  %s11 = inlined_call_operand.vmem [shape: f32[1,128], index: 11, kind: input, shape index: {}]
  %s12 = inlined_call_operand.hbm [shape: f32[8,128], index: 12, kind: output, shape index: {}]
  %s13 = sld [smem:[#allocation0]]
  $region58: #{tpu_custom_call.1} parent=0
    _
  %s15 = ssub.s32 1, %s13
  %s16 = scalar_select 0, %s15, %s13
  $region1: #{tpu_custom_call.1} parent=0
    #allocation2 [shape = 'u8[4096]{0}', space=vmem, size = 0x1000, scoped, tag = 'output window, operand 0, single buffered']
    #allocation3 [shape = 's32[1]{0}', space=sflag, size = 0x4, scoped, tag = 'scoped memory for tpu_custom_call.1']
    %17 = vsyncpa [#allocation3], 0
    // Predicated region
    $region2: #{tpu_custom_call.1} parent=1 // pred_check
      _
    $region3: #{tpu_custom_call.1} parent=1 // pred_check_branch
      %19 = sbr.rel (0) target = $region5
    $region4: #{tpu_custom_call.1} parent=1 // pred_region
      _
    $region5: #{tpu_custom_call.1} parent=1 // pred_fallthru
      _
    // Predicated region
    $region6: #{tpu_custom_call.1} parent=1 // pred_check
      _
    $region7: #{tpu_custom_call.1} parent=1 // pred_check_branch
      %21 = sbr.rel (0) target = $region9
    $region8: #{tpu_custom_call.1} parent=1 // pred_region
      _
    $region9: #{tpu_custom_call.1} parent=1 // pred_fallthru
      _
    // Predicated region
    $region10: #{tpu_custom_call.1} parent=1 // pred_check
      _
    $region11: #{tpu_custom_call.1} parent=1 // pred_check_branch
      %23 = sbr.rel (0) target = $region13
    $region12: #{tpu_custom_call.1} parent=1 // pred_region
      _
    $region13: #{tpu_custom_call.1} parent=1 // pred_fallthru
      _
    // Predicated region
    $region14: #{tpu_custom_call.1} parent=1 // pred_check
      _
    $region15: #{tpu_custom_call.1} parent=1 // pred_check_branch
      %25 = sbr.rel (0) target = $region17
    $region16: #{tpu_custom_call.1} parent=1 // pred_region
      _
    $region17: #{tpu_custom_call.1} parent=1 // pred_fallthru
      _
    // Predicated region
    $region18: #{tpu_custom_call.1} parent=1 // pred_check
      _
    $region19: #{tpu_custom_call.1} parent=1 // pred_check_branch
      %27 = sbr.rel (0) target = $region21
    $region20: #{tpu_custom_call.1} parent=1 // pred_region
      _
    $region21: #{tpu_custom_call.1} parent=1 // pred_fallthru
      _
    // Predicated region
    $region22: #{tpu_custom_call.1} parent=1 // pred_check
      _
    $region23: #{tpu_custom_call.1} parent=1 // pred_check_branch
      %29 = sbr.rel (0) target = $region25
    $region24: #{tpu_custom_call.1} parent=1 // pred_region
      _
    $region25: #{tpu_custom_call.1} parent=1 // pred_fallthru
      _
    // Predicated region
    $region26: #{tpu_custom_call.1} parent=1 // pred_check
      _
    $region27: #{tpu_custom_call.1} parent=1 // pred_check_branch
      %31 = sbr.rel (0) target = $region29
    $region28: #{tpu_custom_call.1} parent=1 // pred_region
      _
    $region29: #{tpu_custom_call.1} parent=1 // pred_fallthru
      _
    // Predicated region
    $region30: #{tpu_custom_call.1} parent=1 // pred_check
      _
    $region31: #{tpu_custom_call.1} parent=1 // pred_check_branch
      %33 = sbr.rel (0) target = $region33
    $region32: #{tpu_custom_call.1} parent=1 // pred_region
      _
    $region33: #{tpu_custom_call.1} parent=1 // pred_fallthru
      _
    // Predicated region
    $region34: #{tpu_custom_call.1} parent=1 // pred_check
      _
    $region35: #{tpu_custom_call.1} parent=1 // pred_check_branch
      %35 = sbr.rel (0) target = $region37
    $region36: #{tpu_custom_call.1} parent=1 // pred_region
      _
    $region37: #{tpu_custom_call.1} parent=1 // pred_fallthru
      _
    // Predicated region
    $region38: #{tpu_custom_call.1} parent=1 // pred_check
      _
    $region39: #{tpu_custom_call.1} parent=1 // pred_check_branch
      %37 = sbr.rel (0) target = $region41
    $region40: #{tpu_custom_call.1} parent=1 // pred_region
      _
    $region41: #{tpu_custom_call.1} parent=1 // pred_fallthru
      _
    // Predicated region
    $region42: #{tpu_custom_call.1} parent=1 // pred_check
      _
    $region43: #{tpu_custom_call.1} parent=1 // pred_check_branch
      %39 = sbr.rel (0) target = $region45
    $region44: #{tpu_custom_call.1} parent=1 // pred_region
      _
    $region45: #{tpu_custom_call.1} parent=1 // pred_fallthru
      _
    // Predicated region
    $region46: #{tpu_custom_call.1} parent=1 // pred_check
      _
    $region47: #{tpu_custom_call.1} parent=1 // pred_check_branch
      %41 = sbr.rel (0) target = $region49
    $region48: #{tpu_custom_call.1} parent=1 // pred_region
      _
    $region49: #{tpu_custom_call.1} parent=1 // pred_fallthru
      _
    %v42 = vlaneseq
    %v43 = vshrl.u32 %v42, 7
    %v44 = vadd.s32 %v43, 8
    %v45 = vadd.s32 %v43, 16
    %v46 = vadd.s32 %v43, 24
    %v47 = vand.u32 %v43, 15
    %v48 = vand.u32 %v44, 15
    %v49 = vand.u32 %v45, 15
    %v50 = vand.u32 %v46, 15
    %v51 = vld [vmem:[%s0] sm:$0xff]
    %v52 = vld [vmem:[%s0 + $0x8] sm:$0xff]
    %v53 = vld [vmem:[%s0 + $0x10] sm:$0xff]
    %v54 = vld [vmem:[%s0 + $0x18] sm:$0xff]
    %v55 = vld [vmem:[%s1] sm:$0xf]
    %v56 = vrot.slane %v51, 1
    %v57 = vrot.slane %v52, 1
    %v58 = vrot.slane %v53, 1
    %v59 = vrot.slane %v54, 1
    %vm60 = vcmp.lt.s32.totalorder %v43, 7
    %v61 = vsel %vm60, %v58, %v59
    %v62 = vsel %vm60, %v57, %v58
    %v63 = vsel %vm60, %v56, %v57
    %v64 = vsel %vm60, %v59, %v56
    %s65 = scalar_lea.vmem %s1, 4
    %v66 = vld [vmem:[%s65] sm:$0xf]
    %vm67 = vcmask 31744
    %v69 = vsel %vm67, %v63, 0
    %v72 = vsel %vm67, %v62, 0
    %v75 = vsel %vm67, %v61, 0
    %v78 = vsel %vm67, %v64, 0
    %vm80 = vcmask 1043456
    %v82 = vsel %vm80, %v66, 0
    %84 = vmatprep.subr.mxu0 0.0
    %85 = vmatpush1.msra.mxu0 0.0
    %86 = vmatprep.subr.mxu0 0.0
    %87 = vmatpush1.msra.mxu0 0.0
    %88 = vmatprep.subr.mxu0 0.0
    %89 = vmatpush1.msra.mxu0 0.0
    %90 = vmatprep.subr.mxu0 0.0
    %91 = vmatpush1.msra.mxu0 0.0
    %92 = vmatprep.subr.mxu0 0.0
    %93 = vmatpush1.msra.mxu0 0.0
    %94 = vmatprep.subr.mxu0 0.0
    %95 = vmatpush1.msra.mxu0 0.0
    %96 = vmatprep.subr.mxu0 0.0
    %97 = vmatpush1.msra.mxu0 0.0
    %98 = vmatprep.subr.mxu0 0.0
    %99 = vmatpush1.msra.mxu0 0.0
    %100 = vmatprep.subr.mxu0 0.0
    %101 = vmatpush1.msra.mxu0 0.0
    %102 = vmatprep.subr.mxu0 0.0
    %103 = vmatpush1.msra.mxu0 0.0
    %104 = vmatprep.subr.mxu0 0.0
    %105 = vmatpush1.msra.mxu0 0.0
    %106 = vmatprep.subr.mxu0 0.0
    %107 = vmatpush1.msra.mxu0 0.0
    %108 = vmatprep.subr.mxu0 0.0
    %109 = vmatpush1.msra.mxu0 0.0
    %110 = vmatprep.subr.mxu0 0.0
    %111 = vmatpush1.msra.mxu0 0.0
    %112 = vmatprep.subr.mxu0 0.0
    %113 = vmatpush1.msra.mxu0 0.0
    %114 = vmatprep.subr.mxu0 0.0
    %115 = vmatpush1.msra.mxu0 %v82
    %116 = vmatprep.subr.mxu0 0.0
    %117 = vmatpush2.msra.mxu0 0.0
    %118 = vmatprep.subr.mxu0 0.0
    %119 = vmatpush2.msra.mxu0 0.0
    %120 = vmatprep.subr.mxu0 0.0
    %121 = vmatpush2.msra.mxu0 0.0
    %122 = vmatprep.subr.mxu0 0.0
    %123 = vmatpush2.msra.mxu0 0.0
    %124 = vmatprep.subr.mxu0 0.0
    %125 = vmatpush2.msra.mxu0 0.0
    %126 = vmatprep.subr.mxu0 0.0
    %127 = vmatpush2.msra.mxu0 0.0
    %128 = vmatprep.subr.mxu0 0.0
    %129 = vmatpush2.msra.mxu0 0.0
    %130 = vmatprep.subr.mxu0 0.0
    %131 = vmatpush2.msra.mxu0 0.0
    %132 = vmatprep.subr.mxu0 0.0
    %133 = vmatpush2.msra.mxu0 0.0
    %134 = vmatprep.subr.mxu0 0.0
    %135 = vmatpush2.msra.mxu0 0.0
    %136 = vmatprep.subr.mxu0 0.0
    %137 = vmatpush2.msra.mxu0 0.0
    %138 = vmatprep.subr.mxu0 0.0
    %139 = vmatpush2.msra.mxu0 0.0
    %140 = vmatprep.subr.mxu0 0.0
    %141 = vmatpush2.msra.mxu0 0.0
    %142 = vmatprep.subr.mxu0 0.0
    %143 = vmatpush2.msra.mxu0 0.0
    %144 = vmatprep.subr.mxu0 0.0
    %145 = vmatpush2.msra.mxu0 0.0
    %146 = vmatprep.subr.mxu0 0.0
    %147 = vmatpush2.msra.mxu0 0.0
    %148 = vmatprep.mubr.f32.mxu0 0.0
    %149 = vmatmul.mubr.f32.gmra.mxu0 %v69
    %v150 = vpop.f32.mrf.mxu0
    %v151 = vadd.f32 0.0, %v150
    %v152 = vpop.f32.mrf.mxu0
    %153 = vmatprep.mubr.f32.mxu0 0.0
    %154 = vmatmul.mubr.f32.gmra.mxu0 %v72
    %v155 = vpop.f32.mrf.mxu0
    %v156 = vadd.f32 0.0, %v155
    %v157 = vpop.f32.mrf.mxu0
    %158 = vmatprep.mubr.f32.mxu0 0.0
    %159 = vmatmul.mubr.f32.gmra.mxu0 %v75
    %v160 = vpop.f32.mrf.mxu0
    %v161 = vadd.f32 0.0, %v160
    %v162 = vpop.f32.mrf.mxu0
    %163 = vmatprep.mubr.f32.mxu0 0.0
    %164 = vmatmul.mubr.f32.gmra.mxu0 %v78
    %v165 = vpop.f32.mrf.mxu0
    %v166 = vadd.f32 0.0, %v165
    %v167 = vpop.f32.mrf.mxu0
    %168 = vdwg.mxu0
    %v169 = vrot.slane %v51, 2
    %v170 = vrot.slane %v52, 2
    %v171 = vrot.slane %v53, 2
    %v172 = vrot.slane %v54, 2
    %vm173 = vcmp.lt.s32.totalorder %v43, 6
    %v174 = vsel %vm173, %v171, %v172
    %v175 = vsel %vm173, %v170, %v171
    %v176 = vsel %vm173, %v169, %v170
    %v177 = vsel %vm173, %v172, %v169
    %s178 = scalar_lea.vmem %s1, 8
    %v179 = vld [vmem:[%s178] sm:$0xf]
    %v180 = vrot.slane %v51, 3
    %v181 = vrot.slane %v52, 3
    %v182 = vrot.slane %v53, 3
    %v183 = vrot.slane %v54, 3
    %vm184 = vcmp.lt.s32.totalorder %v43, 5
    %v185 = vsel %vm184, %v182, %v183
    %v186 = vsel %vm184, %v181, %v182
    %v187 = vsel %vm184, %v180, %v181
    %v188 = vsel %vm184, %v183, %v180
    %s189 = scalar_lea.vmem %s1, 12
    %v190 = vld [vmem:[%s189] sm:$0xf]
    %v192 = vsel %vm67, %v187, 0
    %v195 = vsel %vm67, %v186, 0
    %v198 = vsel %vm67, %v185, 0
    %v201 = vsel %vm67, %v188, 0
    %v204 = vsel %vm80, %v190, 0
    %206 = vmatprep.subr.mxu0 0.0
    %207 = vmatpush1.msra.mxu0 0.0
    %208 = vmatprep.subr.mxu0 0.0
    %209 = vmatpush1.msra.mxu0 0.0
    %210 = vmatprep.subr.mxu0 0.0
    %211 = vmatpush1.msra.mxu0 0.0
    %212 = vmatprep.subr.mxu0 0.0
    %213 = vmatpush1.msra.mxu0 0.0
    %214 = vmatprep.subr.mxu0 0.0
    %215 = vmatpush1.msra.mxu0 0.0
    %216 = vmatprep.subr.mxu0 0.0
    %217 = vmatpush1.msra.mxu0 0.0
    %218 = vmatprep.subr.mxu0 0.0
    %219 = vmatpush1.msra.mxu0 0.0
    %220 = vmatprep.subr.mxu0 0.0
    %221 = vmatpush1.msra.mxu0 0.0
    %222 = vmatprep.subr.mxu0 0.0
    %223 = vmatpush1.msra.mxu0 0.0
    %224 = vmatprep.subr.mxu0 0.0
    %225 = vmatpush1.msra.mxu0 0.0
    %226 = vmatprep.subr.mxu0 0.0
    %227 = vmatpush1.msra.mxu0 0.0
    %228 = vmatprep.subr.mxu0 0.0
    %229 = vmatpush1.msra.mxu0 0.0
    %230 = vmatprep.subr.mxu0 0.0
    %231 = vmatpush1.msra.mxu0 0.0
    %232 = vmatprep.subr.mxu0 0.0
    %233 = vmatpush1.msra.mxu0 0.0
    %234 = vmatprep.subr.mxu0 0.0
    %235 = vmatpush1.msra.mxu0 0.0
    %236 = vmatprep.subr.mxu0 0.0
    %237 = vmatpush1.msra.mxu0 %v204
    %238 = vmatprep.subr.mxu0 0.0
    %239 = vmatpush2.msra.mxu0 0.0
    %240 = vmatprep.subr.mxu0 0.0
    %241 = vmatpush2.msra.mxu0 0.0
    %242 = vmatprep.subr.mxu0 0.0
    %243 = vmatpush2.msra.mxu0 0.0
    %244 = vmatprep.subr.mxu0 0.0
    %245 = vmatpush2.msra.mxu0 0.0
    %246 = vmatprep.subr.mxu0 0.0
    %247 = vmatpush2.msra.mxu0 0.0
    %248 = vmatprep.subr.mxu0 0.0
    %249 = vmatpush2.msra.mxu0 0.0
    %250 = vmatprep.subr.mxu0 0.0
    %251 = vmatpush2.msra.mxu0 0.0
    %252 = vmatprep.subr.mxu0 0.0
    %253 = vmatpush2.msra.mxu0 0.0
    %254 = vmatprep.subr.mxu0 0.0
    %255 = vmatpush2.msra.mxu0 0.0
    %256 = vmatprep.subr.mxu0 0.0
    %257 = vmatpush2.msra.mxu0 0.0
    %258 = vmatprep.subr.mxu0 0.0
    %259 = vmatpush2.msra.mxu0 0.0
    %260 = vmatprep.subr.mxu0 0.0
    %261 = vmatpush2.msra.mxu0 0.0
    %262 = vmatprep.subr.mxu0 0.0
    %263 = vmatpush2.msra.mxu0 0.0
    %264 = vmatprep.subr.mxu0 0.0
    %265 = vmatpush2.msra.mxu0 0.0
    %266 = vmatprep.subr.mxu0 0.0
    %267 = vmatpush2.msra.mxu0 0.0
    %268 = vmatprep.subr.mxu0 0.0
    %269 = vmatpush2.msra.mxu0 0.0
    %270 = vmatprep.mubr.f32.mxu0 0.0
    %271 = vmatmul.mubr.f32.gmra.mxu0 %v192
    %v272 = vpop.f32.mrf.mxu0
    %v273 = vadd.f32 0.0, %v272
    %v274 = vpop.f32.mrf.mxu0
    %275 = vmatprep.mubr.f32.mxu0 0.0
    %276 = vmatmul.mubr.f32.gmra.mxu0 %v195
    %v277 = vpop.f32.mrf.mxu0
    %v278 = vadd.f32 0.0, %v277
    %v279 = vpop.f32.mrf.mxu0
    %280 = vmatprep.mubr.f32.mxu0 0.0
    %281 = vmatmul.mubr.f32.gmra.mxu0 %v198
    %v282 = vpop.f32.mrf.mxu0
    %v283 = vadd.f32 0.0, %v282
    %v284 = vpop.f32.mrf.mxu0
    %285 = vmatprep.mubr.f32.mxu0 0.0
    %286 = vmatmul.mubr.f32.gmra.mxu0 %v201
    %v287 = vpop.f32.mrf.mxu0
    %v288 = vadd.f32 0.0, %v287
    %v289 = vpop.f32.mrf.mxu0
    %290 = vdwg.mxu0
    %v291 = vrot.slane %v51, 4
    %v292 = vrot.slane %v52, 4
    %v293 = vrot.slane %v53, 4
    %v294 = vrot.slane %v54, 4
    %vm295 = vcmp.lt.s32.totalorder %v43, 4
    %v296 = vsel %vm295, %v293, %v294
    %v297 = vsel %vm295, %v292, %v293
    %v298 = vsel %vm295, %v291, %v292
    %v299 = vsel %vm295, %v294, %v291
    %s300 = scalar_lea.vmem %s1, 16
    %v301 = vld [vmem:[%s300] sm:$0xf]
    %v303 = vsel %vm67, %v298, 0
    %v306 = vsel %vm67, %v297, 0
    %v309 = vsel %vm67, %v296, 0
    %v312 = vsel %vm67, %v299, 0
    %v315 = vsel %vm80, %v301, 0
    %317 = vmatprep.subr.mxu0 0.0
    %318 = vmatpush1.msra.mxu0 0.0
    %319 = vmatprep.subr.mxu0 0.0
    %320 = vmatpush1.msra.mxu0 0.0
    %321 = vmatprep.subr.mxu0 0.0
    %322 = vmatpush1.msra.mxu0 0.0
    %323 = vmatprep.subr.mxu0 0.0
    %324 = vmatpush1.msra.mxu0 0.0
    %325 = vmatprep.subr.mxu0 0.0
    %326 = vmatpush1.msra.mxu0 0.0
    %327 = vmatprep.subr.mxu0 0.0
    %328 = vmatpush1.msra.mxu0 0.0
    %329 = vmatprep.subr.mxu0 0.0
    %330 = vmatpush1.msra.mxu0 0.0
    %331 = vmatprep.subr.mxu0 0.0
    %332 = vmatpush1.msra.mxu0 0.0
    %333 = vmatprep.subr.mxu0 0.0
    %334 = vmatpush1.msra.mxu0 0.0
    %335 = vmatprep.subr.mxu0 0.0
    %336 = vmatpush1.msra.mxu0 0.0
    %337 = vmatprep.subr.mxu0 0.0
    %338 = vmatpush1.msra.mxu0 0.0
    %339 = vmatprep.subr.mxu0 0.0
    %340 = vmatpush1.msra.mxu0 0.0
    %341 = vmatprep.subr.mxu0 0.0
    %342 = vmatpush1.msra.mxu0 0.0
    %343 = vmatprep.subr.mxu0 0.0
    %344 = vmatpush1.msra.mxu0 0.0
    %345 = vmatprep.subr.mxu0 0.0
    %346 = vmatpush1.msra.mxu0 0.0
    %347 = vmatprep.subr.mxu0 0.0
    %348 = vmatpush1.msra.mxu0 %v315
    %349 = vmatprep.subr.mxu0 0.0
    %350 = vmatpush2.msra.mxu0 0.0
    %351 = vmatprep.subr.mxu0 0.0
    %352 = vmatpush2.msra.mxu0 0.0
    %353 = vmatprep.subr.mxu0 0.0
    %354 = vmatpush2.msra.mxu0 0.0
    %355 = vmatprep.subr.mxu0 0.0
    %356 = vmatpush2.msra.mxu0 0.0
    %357 = vmatprep.subr.mxu0 0.0
    %358 = vmatpush2.msra.mxu0 0.0
    %359 = vmatprep.subr.mxu0 0.0
    %360 = vmatpush2.msra.mxu0 0.0
    %361 = vmatprep.subr.mxu0 0.0
    %362 = vmatpush2.msra.mxu0 0.0
    %363 = vmatprep.subr.mxu0 0.0
    %364 = vmatpush2.msra.mxu0 0.0
    %365 = vmatprep.subr.mxu0 0.0
    %366 = vmatpush2.msra.mxu0 0.0
    %367 = vmatprep.subr.mxu0 0.0
    %368 = vmatpush2.msra.mxu0 0.0
    %369 = vmatprep.subr.mxu0 0.0
    %370 = vmatpush2.msra.mxu0 0.0
    %371 = vmatprep.subr.mxu0 0.0
    %372 = vmatpush2.msra.mxu0 0.0
    %373 = vmatprep.subr.mxu0 0.0
    %374 = vmatpush2.msra.mxu0 0.0
    %375 = vmatprep.subr.mxu0 0.0
    %376 = vmatpush2.msra.mxu0 0.0
    %377 = vmatprep.subr.mxu0 0.0
    %378 = vmatpush2.msra.mxu0 0.0
    %379 = vmatprep.subr.mxu0 0.0
    %380 = vmatpush2.msra.mxu0 0.0
    %381 = vmatprep.mubr.f32.mxu0 0.0
    %382 = vmatmul.mubr.f32.gmra.mxu0 %v303
    %v383 = vpop.f32.mrf.mxu0
    %v384 = vadd.f32 0.0, %v383
    %v385 = vpop.f32.mrf.mxu0
    %386 = vmatprep.mubr.f32.mxu0 0.0
    %387 = vmatmul.mubr.f32.gmra.mxu0 %v306
    %v388 = vpop.f32.mrf.mxu0
    %v389 = vadd.f32 0.0, %v388
    %v390 = vpop.f32.mrf.mxu0
    %391 = vmatprep.mubr.f32.mxu0 0.0
    %392 = vmatmul.mubr.f32.gmra.mxu0 %v309
    %v393 = vpop.f32.mrf.mxu0
    %v394 = vadd.f32 0.0, %v393
    %v395 = vpop.f32.mrf.mxu0
    %396 = vmatprep.mubr.f32.mxu0 0.0
    %397 = vmatmul.mubr.f32.gmra.mxu0 %v312
    %v398 = vpop.f32.mrf.mxu0
    %v399 = vadd.f32 0.0, %v398
    %v400 = vpop.f32.mrf.mxu0
    %401 = vdwg.mxu0
    %v403 = vsel %vm67, %v51, 0
    %v406 = vsel %vm67, %v52, 0
    %v409 = vsel %vm67, %v53, 0
    %v412 = vsel %vm67, %v54, 0
    %v415 = vsel %vm80, %v55, 0
    %417 = vmatprep.subr.mxu0 0.0
    %418 = vmatpush1.msra.mxu0 0.0
    %419 = vmatprep.subr.mxu0 0.0
    %420 = vmatpush1.msra.mxu0 0.0
    %421 = vmatprep.subr.mxu0 0.0
    %422 = vmatpush1.msra.mxu0 0.0
    %423 = vmatprep.subr.mxu0 0.0
    %424 = vmatpush1.msra.mxu0 0.0
    %425 = vmatprep.subr.mxu0 0.0
    %426 = vmatpush1.msra.mxu0 0.0
    %427 = vmatprep.subr.mxu0 0.0
    %428 = vmatpush1.msra.mxu0 0.0
    %429 = vmatprep.subr.mxu0 0.0
    %430 = vmatpush1.msra.mxu0 0.0
    %431 = vmatprep.subr.mxu0 0.0
    %432 = vmatpush1.msra.mxu0 0.0
    %433 = vmatprep.subr.mxu0 0.0
    %434 = vmatpush1.msra.mxu0 0.0
    %435 = vmatprep.subr.mxu0 0.0
    %436 = vmatpush1.msra.mxu0 0.0
    %437 = vmatprep.subr.mxu0 0.0
    %438 = vmatpush1.msra.mxu0 0.0
    %439 = vmatprep.subr.mxu0 0.0
    %440 = vmatpush1.msra.mxu0 0.0
    %441 = vmatprep.subr.mxu0 0.0
    %442 = vmatpush1.msra.mxu0 0.0
    %443 = vmatprep.subr.mxu0 0.0
    %444 = vmatpush1.msra.mxu0 0.0
    %445 = vmatprep.subr.mxu0 0.0
    %446 = vmatpush1.msra.mxu0 0.0
    %447 = vmatprep.subr.mxu0 0.0
    %448 = vmatpush1.msra.mxu0 %v415
    %449 = vmatprep.subr.mxu0 0.0
    %450 = vmatpush2.msra.mxu0 0.0
    %451 = vmatprep.subr.mxu0 0.0
    %452 = vmatpush2.msra.mxu0 0.0
    %453 = vmatprep.subr.mxu0 0.0
    %454 = vmatpush2.msra.mxu0 0.0
    %455 = vmatprep.subr.mxu0 0.0
    %456 = vmatpush2.msra.mxu0 0.0
    %457 = vmatprep.subr.mxu0 0.0
    %458 = vmatpush2.msra.mxu0 0.0
    %459 = vmatprep.subr.mxu0 0.0
    %460 = vmatpush2.msra.mxu0 0.0
    %461 = vmatprep.subr.mxu0 0.0
    %462 = vmatpush2.msra.mxu0 0.0
    %463 = vmatprep.subr.mxu0 0.0
    %464 = vmatpush2.msra.mxu0 0.0
    %465 = vmatprep.subr.mxu0 0.0
    %466 = vmatpush2.msra.mxu0 0.0
    %467 = vmatprep.subr.mxu0 0.0
    %468 = vmatpush2.msra.mxu0 0.0
    %469 = vmatprep.subr.mxu0 0.0
    %470 = vmatpush2.msra.mxu0 0.0
    %471 = vmatprep.subr.mxu0 0.0
    %472 = vmatpush2.msra.mxu0 0.0
    %473 = vmatprep.subr.mxu0 0.0
    %474 = vmatpush2.msra.mxu0 0.0
    %475 = vmatprep.subr.mxu0 0.0
    %476 = vmatpush2.msra.mxu0 0.0
    %477 = vmatprep.subr.mxu0 0.0
    %478 = vmatpush2.msra.mxu0 0.0
    %479 = vmatprep.subr.mxu0 0.0
    %480 = vmatpush2.msra.mxu0 0.0
    %481 = vmatprep.mubr.f32.mxu0 0.0
    %482 = vmatmul.mubr.f32.gmra.mxu0 %v403
    %v483 = vpop.f32.mrf.mxu0
    %v484 = vadd.f32 %v151, %v483
    %v485 = vpop.f32.mrf.mxu0
    %486 = vmatprep.mubr.f32.mxu0 0.0
    %487 = vmatmul.mubr.f32.gmra.mxu0 %v406
    %v488 = vpop.f32.mrf.mxu0
    %v489 = vadd.f32 %v156, %v488
    %v490 = vpop.f32.mrf.mxu0
    %491 = vmatprep.mubr.f32.mxu0 0.0
    %492 = vmatmul.mubr.f32.gmra.mxu0 %v409
    %v493 = vpop.f32.mrf.mxu0
    %v494 = vadd.f32 %v161, %v493
    %v495 = vpop.f32.mrf.mxu0
    %496 = vmatprep.mubr.f32.mxu0 0.0
    %497 = vmatmul.mubr.f32.gmra.mxu0 %v412
    %v498 = vpop.f32.mrf.mxu0
    %v499 = vadd.f32 %v166, %v498
    %v500 = vpop.f32.mrf.mxu0
    %501 = vdwg.mxu0
    %v503 = vsel %vm67, %v176, 0
    %v506 = vsel %vm67, %v175, 0
    %v509 = vsel %vm67, %v174, 0
    %v512 = vsel %vm67, %v177, 0
    %v515 = vsel %vm80, %v179, 0
    %517 = vmatprep.subr.mxu0 0.0
    %518 = vmatpush1.msra.mxu0 0.0
    %519 = vmatprep.subr.mxu0 0.0
    %520 = vmatpush1.msra.mxu0 0.0
    %521 = vmatprep.subr.mxu0 0.0
    %522 = vmatpush1.msra.mxu0 0.0
    %523 = vmatprep.subr.mxu0 0.0
    %524 = vmatpush1.msra.mxu0 0.0
    %525 = vmatprep.subr.mxu0 0.0
    %526 = vmatpush1.msra.mxu0 0.0
    %527 = vmatprep.subr.mxu0 0.0
    %528 = vmatpush1.msra.mxu0 0.0
    %529 = vmatprep.subr.mxu0 0.0
    %530 = vmatpush1.msra.mxu0 0.0
    %531 = vmatprep.subr.mxu0 0.0
    %532 = vmatpush1.msra.mxu0 0.0
    %533 = vmatprep.subr.mxu0 0.0
    %534 = vmatpush1.msra.mxu0 0.0
    %535 = vmatprep.subr.mxu0 0.0
    %536 = vmatpush1.msra.mxu0 0.0
    %537 = vmatprep.subr.mxu0 0.0
    %538 = vmatpush1.msra.mxu0 0.0
    %539 = vmatprep.subr.mxu0 0.0
    %540 = vmatpush1.msra.mxu0 0.0
    %541 = vmatprep.subr.mxu0 0.0
    %542 = vmatpush1.msra.mxu0 0.0
    %543 = vmatprep.subr.mxu0 0.0
    %544 = vmatpush1.msra.mxu0 0.0
    %545 = vmatprep.subr.mxu0 0.0
    %546 = vmatpush1.msra.mxu0 0.0
    %547 = vmatprep.subr.mxu0 0.0
    %548 = vmatpush1.msra.mxu0 %v515
    %549 = vmatprep.subr.mxu0 0.0
    %550 = vmatpush2.msra.mxu0 0.0
    %551 = vmatprep.subr.mxu0 0.0
    %552 = vmatpush2.msra.mxu0 0.0
    %553 = vmatprep.subr.mxu0 0.0
    %554 = vmatpush2.msra.mxu0 0.0
    %555 = vmatprep.subr.mxu0 0.0
    %556 = vmatpush2.msra.mxu0 0.0
    %557 = vmatprep.subr.mxu0 0.0
    %558 = vmatpush2.msra.mxu0 0.0
    %559 = vmatprep.subr.mxu0 0.0
    %560 = vmatpush2.msra.mxu0 0.0
    %561 = vmatprep.subr.mxu0 0.0
    %562 = vmatpush2.msra.mxu0 0.0
    %563 = vmatprep.subr.mxu0 0.0
    %564 = vmatpush2.msra.mxu0 0.0
    %565 = vmatprep.subr.mxu0 0.0
    %566 = vmatpush2.msra.mxu0 0.0
    %567 = vmatprep.subr.mxu0 0.0
    %568 = vmatpush2.msra.mxu0 0.0
    %569 = vmatprep.subr.mxu0 0.0
    %570 = vmatpush2.msra.mxu0 0.0
    %571 = vmatprep.subr.mxu0 0.0
    %572 = vmatpush2.msra.mxu0 0.0
    %573 = vmatprep.subr.mxu0 0.0
    %574 = vmatpush2.msra.mxu0 0.0
    %575 = vmatprep.subr.mxu0 0.0
    %576 = vmatpush2.msra.mxu0 0.0
    %577 = vmatprep.subr.mxu0 0.0
    %578 = vmatpush2.msra.mxu0 0.0
    %579 = vmatprep.subr.mxu0 0.0
    %580 = vmatpush2.msra.mxu0 0.0
    %581 = vmatprep.mubr.f32.mxu0 0.0
    %582 = vmatmul.mubr.f32.gmra.mxu0 %v503
    %v583 = vpop.f32.mrf.mxu0
    %v584 = vadd.f32 %v273, %v583
    %v585 = vpop.f32.mrf.mxu0
    %586 = vmatprep.mubr.f32.mxu0 0.0
    %587 = vmatmul.mubr.f32.gmra.mxu0 %v506
    %v588 = vpop.f32.mrf.mxu0
    %v589 = vadd.f32 %v278, %v588
    %v590 = vpop.f32.mrf.mxu0
    %591 = vmatprep.mubr.f32.mxu0 0.0
    %592 = vmatmul.mubr.f32.gmra.mxu0 %v509
    %v593 = vpop.f32.mrf.mxu0
    %v594 = vadd.f32 %v283, %v593
    %v595 = vpop.f32.mrf.mxu0
    %596 = vmatprep.mubr.f32.mxu0 0.0
    %597 = vmatmul.mubr.f32.gmra.mxu0 %v512
    %v598 = vpop.f32.mrf.mxu0
    %v599 = vadd.f32 %v288, %v598
    %v600 = vpop.f32.mrf.mxu0
    %601 = vdwg.mxu0
    %v602 = vadd.f32 %v484, %v584
    %v603 = vadd.f32 %v489, %v589
    %v604 = vadd.f32 %v494, %v594
    %v605 = vadd.f32 %v499, %v599
    %v606 = vadd.f32 %v602, %v384
    %v607 = vadd.f32 %v603, %v389
    %v608 = vadd.f32 %v604, %v394
    %v609 = vadd.f32 %v605, %v399
    %vm610 = vcmp.lt.s32.totalorder %v47, 12
    %vm611 = vcmp.lt.s32.totalorder %v48, 12
    %vm612 = vcmp.lt.s32.totalorder %v49, 12
    %vm613 = vcmp.lt.s32.totalorder %v50, 12
    %v614 = vsel %vm610, 1, 0
    %v615 = vsel %vm611, 1, 0
    %v616 = vsel %vm612, 1, 0
    %v617 = vsel %vm613, 1, 0
    %v618 = vcvt.s32.f32 %v614
    %v619 = vcvt.s32.f32 %v615
    %v620 = vcvt.s32.f32 %v616
    %v621 = vcvt.s32.f32 %v617
    %v622 = vmul.f32 %v606, %v618
    %v623 = vmul.f32 %v607, %v619
    %v624 = vmul.f32 %v608, %v620
    %v625 = vmul.f32 %v609, %v621
    %vm626 = vcmask 130048
    %v627 = vsel %vm626, %v622, 0.0
    %v628 = vsel %vm626, %v623, 0.0
    %v629 = vadd.f32 %v627, %v628
    %v630 = vsel %vm626, %v624, 0.0
    %v631 = vadd.f32 %v629, %v630
    %v632 = vsel %vm626, %v625, 0.0
    %v633 = vadd.f32 %v631, %v632
    %v634 = vrot.slane %v633, 4
    %v635 = vadd.f32 %v633, %v634
    %v636 = vrot.slane %v635, 2
    %v637 = vadd.f32 %v635, %v636
    %v638 = vrot.slane %v637, 1
    %v639 = vadd.f32 %v637, %v638
    %v640 = vmul.f32 %v639, 0.041666668
    %v641 = vmul.f32 %v622, %v606
    %v642 = vmul.f32 %v623, %v607
    %v643 = vmul.f32 %v624, %v608
    %v644 = vmul.f32 %v625, %v609
    %v645 = vsel %vm626, %v641, 0.0
    %v646 = vsel %vm626, %v642, 0.0
    %v647 = vadd.f32 %v645, %v646
    %v648 = vsel %vm626, %v643, 0.0
    %v649 = vadd.f32 %v647, %v648
    %v650 = vsel %vm626, %v644, 0.0
    %v651 = vadd.f32 %v649, %v650
    %v652 = vrot.slane %v651, 4
    %v653 = vadd.f32 %v651, %v652
    %v654 = vrot.slane %v653, 2
    %v655 = vadd.f32 %v653, %v654
    %v656 = vrot.slane %v655, 1
    %v657 = vadd.f32 %v655, %v656
    %v658 = vmul.f32 %v657, 0.041666668
    %v659 = vmul.f32 %v640, %v640
    %v660 = vsub.f32 %v658, %v659
    %v661 = vadd.f32 %v660, 1e-05
    %v662 = vrsqrt.pop %v661
    %v663 = vld [vmem:[%s2] sm:$0x1]
    %v664 = vmul.f32 %v662, %v663
    %v665 = vld [vmem:[%s3] sm:$0x1]
    %v666 = vmul.f32 %v640, %v664
    %v667 = vsub.f32 %v665, %v666
    %v668 = vlaneseq
    %v669 = vshrl.u32 %v668, 7
    %v670 = vsub.s32 0, %v669
    %v671 = vrot.slane %v664, %v670
    %v672 = vmul.f32 %v606, %v671
    %v673 = vmul.f32 %v607, %v671
    %v674 = vmul.f32 %v608, %v671
    %v675 = vmul.f32 %v609, %v671
    %v677 = vlaneseq
    %v678 = vshrl.u32 %v677, 7
    %v679 = vsub.s32 0, %v678
    %v680 = vrot.slane %v667, %v679
    %v682 = vadd.f32 %v672, %v680
    %v683 = vadd.f32 %v673, %v680
    %v684 = vadd.f32 %v674, %v680
    %v685 = vadd.f32 %v675, %v680
    %v686 = vmax.f32 %v682, 0.0
    %v687 = vmax.f32 %v683, 0.0
    %v688 = vmax.f32 %v684, 0.0
    %v689 = vmax.f32 %v685, 0.0
    %v690 = vrot.slane %v686, 1
    %v691 = vrot.slane %v687, 1
    %v692 = vrot.slane %v688, 1
    %v693 = vrot.slane %v689, 1
    %v694 = vsel %vm60, %v692, %v693
    %v695 = vsel %vm60, %v691, %v692
    %v696 = vsel %vm60, %v690, %v691
    %v697 = vsel %vm60, %v693, %v690
    %v698 = vrot.slane %v686, 2
    %v699 = vrot.slane %v687, 2
    %v700 = vrot.slane %v688, 2
    %v701 = vrot.slane %v689, 2
    %v702 = vsel %vm173, %v700, %v701
    %v703 = vsel %vm173, %v699, %v700
    %v704 = vsel %vm173, %v698, %v699
    %v705 = vsel %vm173, %v701, %v698
    %v706 = vrot.slane %v686, 3
    %v707 = vrot.slane %v687, 3
    %v708 = vrot.slane %v688, 3
    %v709 = vrot.slane %v689, 3
    %v710 = vsel %vm184, %v708, %v709
    %v711 = vsel %vm184, %v707, %v708
    %v712 = vsel %vm184, %v706, %v707
    %v713 = vsel %vm184, %v709, %v706
    %v714 = vrot.slane %v686, 4
    %v715 = vrot.slane %v687, 4
    %v716 = vrot.slane %v688, 4
    %v717 = vrot.slane %v689, 4
    %v718 = vsel %vm295, %v716, %v717
    %v719 = vsel %vm295, %v715, %v716
    %v720 = vsel %vm295, %v714, %v715
    %v721 = vsel %vm295, %v717, %v714
    %726 = vrot.lane.b32.xlu0 %v696, 16
    %v727 = vpop.permute.xlu0 %726
    %728 = vrot.lane.b32.xlu0 %v695, 16
    %v729 = vpop.permute.xlu0 %728
    %730 = vrot.lane.b32.xlu0 %v694, 16
    %v731 = vpop.permute.xlu0 %730
    %732 = vrot.lane.b32.xlu0 %v697, 16
    %v733 = vpop.permute.xlu0 %732
    %742 = vrot.lane.b32.xlu0 %v704, 32
    %v743 = vpop.permute.xlu0 %742
    %744 = vrot.lane.b32.xlu0 %v703, 32
    %v745 = vpop.permute.xlu0 %744
    %746 = vrot.lane.b32.xlu0 %v702, 32
    %v747 = vpop.permute.xlu0 %746
    %748 = vrot.lane.b32.xlu0 %v705, 32
    %v749 = vpop.permute.xlu0 %748
    %758 = vrot.lane.b32.xlu0 %v712, 48
    %v759 = vpop.permute.xlu0 %758
    %760 = vrot.lane.b32.xlu0 %v711, 48
    %v761 = vpop.permute.xlu0 %760
    %762 = vrot.lane.b32.xlu0 %v710, 48
    %v763 = vpop.permute.xlu0 %762
    %764 = vrot.lane.b32.xlu0 %v713, 48
    %v765 = vpop.permute.xlu0 %764
    %774 = vrot.lane.b32.xlu0 %v720, 64
    %v775 = vpop.permute.xlu0 %774
    %776 = vrot.lane.b32.xlu0 %v719, 64
    %v777 = vpop.permute.xlu0 %776
    %778 = vrot.lane.b32.xlu0 %v718, 64
    %v779 = vpop.permute.xlu0 %778
    %780 = vrot.lane.b32.xlu0 %v721, 64
    %v781 = vpop.permute.xlu0 %780
    %v786 = vsel %vm626, %v686, %v727
    %v787 = vsel %vm626, %v687, %v729
    %v788 = vsel %vm626, %v688, %v731
    %v789 = vsel %vm626, %v689, %v733
    %vm790 = vcmask 261120
    %v791 = vsel %vm790, %v786, %v743
    %v792 = vsel %vm790, %v787, %v745
    %v793 = vsel %vm790, %v788, %v747
    %v794 = vsel %vm790, %v789, %v749
    %vm795 = vcmask 392192
    %v796 = vsel %vm795, %v791, %v759
    %v797 = vsel %vm795, %v792, %v761
    %v798 = vsel %vm795, %v793, %v763
    %v799 = vsel %vm795, %v794, %v765
    %vm800 = vcmask 523264
    %v801 = vsel %vm800, %v796, %v775
    %v802 = vsel %vm800, %v797, %v777
    %v803 = vsel %vm800, %v798, %v779
    %v804 = vsel %vm800, %v799, %v781
    %v805 = vld [vmem:[%s4] sm:$0xff]
    %v806 = vld [vmem:[%s4 + $0x8] sm:$0xff]
    %v807 = vld [vmem:[%s4 + $0x10] sm:$0xff]
    %v808 = vld [vmem:[%s4 + $0x18] sm:$0xff]
    %v809 = vld [vmem:[%s4 + $0x20] sm:$0xff]
    %v810 = vld [vmem:[%s4 + $0x28] sm:$0xff]
    %v811 = vld [vmem:[%s4 + $0x30] sm:$0xff]
    %v812 = vld [vmem:[%s4 + $0x38] sm:$0xff]
    %v813 = vld [vmem:[%s4 + $0x40] sm:$0xff]
    %v814 = vld [vmem:[%s4 + $0x48] sm:$0xff]
    %vm815 = vcmask 654336
    %v817 = vsel %vm815, %v801, 0
    %v820 = vsel %vm815, %v802, 0
    %v823 = vsel %vm815, %v803, 0
    %v826 = vsel %vm815, %v804, 0
    %828 = vmatprep.subr.mxu0 0.0
    %829 = vmatpush1.msra.mxu0 0.0
    %830 = vmatprep.subr.mxu0 0.0
    %831 = vmatpush1.msra.mxu0 0.0
    %832 = vmatprep.subr.mxu0 0.0
    %833 = vmatpush1.msra.mxu0 0.0
    %834 = vmatprep.subr.mxu0 0.0
    %835 = vmatpush1.msra.mxu0 0.0
    %836 = vmatprep.subr.mxu0 0.0
    %837 = vmatpush1.msra.mxu0 0.0
    %838 = vmatprep.subr.mxu0 0.0
    %839 = vmatpush1.msra.mxu0 0.0
    %840 = vmatprep.subr.mxu0 0.0
    %841 = vmatpush1.msra.mxu0 %v814
    %842 = vmatprep.subr.mxu0 0.0
    %843 = vmatpush1.msra.mxu0 %v813
    %844 = vmatprep.subr.mxu0 0.0
    %845 = vmatpush1.msra.mxu0 %v812
    %846 = vmatprep.subr.mxu0 0.0
    %847 = vmatpush1.msra.mxu0 %v811
    %848 = vmatprep.subr.mxu0 0.0
    %849 = vmatpush1.msra.mxu0 %v810
    %850 = vmatprep.subr.mxu0 0.0
    %851 = vmatpush1.msra.mxu0 %v809
    %852 = vmatprep.subr.mxu0 0.0
    %853 = vmatpush1.msra.mxu0 %v808
    %854 = vmatprep.subr.mxu0 0.0
    %855 = vmatpush1.msra.mxu0 %v807
    %856 = vmatprep.subr.mxu0 0.0
    %857 = vmatpush1.msra.mxu0 %v806
    %858 = vmatprep.subr.mxu0 0.0
    %859 = vmatpush1.msra.mxu0 %v805
    %860 = vmatprep.subr.mxu0 0.0
    %861 = vmatpush2.msra.mxu0 0.0
    %862 = vmatprep.subr.mxu0 0.0
    %863 = vmatpush2.msra.mxu0 0.0
    %864 = vmatprep.subr.mxu0 0.0
    %865 = vmatpush2.msra.mxu0 0.0
    %866 = vmatprep.subr.mxu0 0.0
    %867 = vmatpush2.msra.mxu0 0.0
    %868 = vmatprep.subr.mxu0 0.0
    %869 = vmatpush2.msra.mxu0 0.0
    %870 = vmatprep.subr.mxu0 0.0
    %871 = vmatpush2.msra.mxu0 0.0
    %872 = vmatprep.subr.mxu0 0.0
    %873 = vmatpush2.msra.mxu0 0.0
    %874 = vmatprep.subr.mxu0 0.0
    %875 = vmatpush2.msra.mxu0 0.0
    %876 = vmatprep.subr.mxu0 0.0
    %877 = vmatpush2.msra.mxu0 0.0
    %878 = vmatprep.subr.mxu0 0.0
    %879 = vmatpush2.msra.mxu0 0.0
    %880 = vmatprep.subr.mxu0 0.0
    %881 = vmatpush2.msra.mxu0 0.0
    %882 = vmatprep.subr.mxu0 0.0
    %883 = vmatpush2.msra.mxu0 0.0
    %884 = vmatprep.subr.mxu0 0.0
    %885 = vmatpush2.msra.mxu0 0.0
    %886 = vmatprep.subr.mxu0 0.0
    %887 = vmatpush2.msra.mxu0 0.0
    %888 = vmatprep.subr.mxu0 0.0
    %889 = vmatpush2.msra.mxu0 0.0
    %890 = vmatprep.subr.mxu0 0.0
    %891 = vmatpush2.msra.mxu0 0.0
    %892 = vmatprep.mubr.f32.mxu0 0.0
    %893 = vmatmul.mubr.f32.gmra.mxu0 %v817
    %v894 = vpop.f32.mrf.mxu0
    %v895 = vadd.f32 0.0, %v894
    %v896 = vpop.f32.mrf.mxu0
    %897 = vmatprep.mubr.f32.mxu0 0.0
    %898 = vmatmul.mubr.f32.gmra.mxu0 %v820
    %v899 = vpop.f32.mrf.mxu0
    %v900 = vadd.f32 0.0, %v899
    %v901 = vpop.f32.mrf.mxu0
    %902 = vmatprep.mubr.f32.mxu0 0.0
    %903 = vmatmul.mubr.f32.gmra.mxu0 %v823
    %v904 = vpop.f32.mrf.mxu0
    %v905 = vadd.f32 0.0, %v904
    %v906 = vpop.f32.mrf.mxu0
    %907 = vmatprep.mubr.f32.mxu0 0.0
    %908 = vmatmul.mubr.f32.gmra.mxu0 %v826
    %v909 = vpop.f32.mrf.mxu0
    %v910 = vadd.f32 0.0, %v909
    %v911 = vpop.f32.mrf.mxu0
    %912 = vdwg.mxu0
    %vm913 = vcmp.lt.s32.totalorder %v47, 8
    %vm914 = vcmp.lt.s32.totalorder %v48, 8
    %vm915 = vcmp.lt.s32.totalorder %v49, 8
    %vm916 = vcmp.lt.s32.totalorder %v50, 8
    %v917 = vsel %vm913, 1, 0
    %v918 = vsel %vm914, 1, 0
    %v919 = vsel %vm915, 1, 0
    %v920 = vsel %vm916, 1, 0
    %v921 = vcvt.s32.f32 %v917
    %v922 = vcvt.s32.f32 %v918
    %v923 = vcvt.s32.f32 %v919
    %v924 = vcvt.s32.f32 %v920
    %v925 = vmul.f32 %v895, %v921
    %v926 = vmul.f32 %v900, %v922
    %v927 = vmul.f32 %v905, %v923
    %v928 = vmul.f32 %v910, %v924
    %v929 = vsel %vm790, %v925, 0.0
    %v930 = vsel %vm790, %v926, 0.0
    %v931 = vadd.f32 %v929, %v930
    %v932 = vsel %vm790, %v927, 0.0
    %v933 = vadd.f32 %v931, %v932
    %v934 = vsel %vm790, %v928, 0.0
    %v935 = vadd.f32 %v933, %v934
    %v936 = vrot.slane %v935, 4
    %v937 = vadd.f32 %v935, %v936
    %v938 = vrot.slane %v937, 2
    %v939 = vadd.f32 %v937, %v938
    %v940 = vrot.slane %v939, 1
    %v941 = vadd.f32 %v939, %v940
    %v942 = vmul.f32 %v941, 0.0625
    %v943 = vmul.f32 %v925, %v895
    %v944 = vmul.f32 %v926, %v900
    %v945 = vmul.f32 %v927, %v905
    %v946 = vmul.f32 %v928, %v910
    %v947 = vsel %vm790, %v943, 0.0
    %v948 = vsel %vm790, %v944, 0.0
    %v949 = vadd.f32 %v947, %v948
    %v950 = vsel %vm790, %v945, 0.0
    %v951 = vadd.f32 %v949, %v950
    %v952 = vsel %vm790, %v946, 0.0
    %v953 = vadd.f32 %v951, %v952
    %v954 = vrot.slane %v953, 4
    %v955 = vadd.f32 %v953, %v954
    %v956 = vrot.slane %v955, 2
    %v957 = vadd.f32 %v955, %v956
    %v958 = vrot.slane %v957, 1
    %v959 = vadd.f32 %v957, %v958
    %v960 = vmul.f32 %v959, 0.0625
    %v961 = vmul.f32 %v942, %v942
    %v962 = vsub.f32 %v960, %v961
    %v963 = vadd.f32 %v962, 1e-05
    %v964 = vrsqrt.pop %v963
    %v965 = vld [vmem:[%s5] sm:$0x1]
    %v966 = vmul.f32 %v964, %v965
    %v967 = vld [vmem:[%s6] sm:$0x1]
    %v968 = vmul.f32 %v942, %v966
    %v969 = vsub.f32 %v967, %v968
    %v970 = vlaneseq
    %v971 = vshrl.u32 %v970, 7
    %v972 = vsub.s32 0, %v971
    %v973 = vrot.slane %v966, %v972
    %v974 = vmul.f32 %v895, %v973
    %v975 = vmul.f32 %v900, %v973
    %v976 = vmul.f32 %v905, %v973
    %v977 = vmul.f32 %v910, %v973
    %v979 = vlaneseq
    %v980 = vshrl.u32 %v979, 7
    %v981 = vsub.s32 0, %v980
    %v982 = vrot.slane %v969, %v981
    %v984 = vadd.f32 %v974, %v982
    %v985 = vadd.f32 %v975, %v982
    %v986 = vadd.f32 %v976, %v982
    %v987 = vadd.f32 %v977, %v982
    %v988 = vmax.f32 %v984, 0.0
    %v989 = vmax.f32 %v985, 0.0
    %v990 = vmax.f32 %v986, 0.0
    %v991 = vmax.f32 %v987, 0.0
    %v992 = vrot.slane %v988, 1
    %v993 = vrot.slane %v989, 1
    %v994 = vrot.slane %v990, 1
    %v995 = vrot.slane %v991, 1
    %v996 = vsel %vm60, %v994, %v995
    %v997 = vsel %vm60, %v993, %v994
    %v998 = vsel %vm60, %v992, %v993
    %v999 = vsel %vm60, %v995, %v992
    %v1000 = vrot.slane %v988, 2
    %v1001 = vrot.slane %v989, 2
    %v1002 = vrot.slane %v990, 2
    %v1003 = vrot.slane %v991, 2
    %v1004 = vsel %vm173, %v1002, %v1003
    %v1005 = vsel %vm173, %v1001, %v1002
    %v1006 = vsel %vm173, %v1000, %v1001
    %v1007 = vsel %vm173, %v1003, %v1000
    %v1008 = vrot.slane %v988, 3
    %v1009 = vrot.slane %v989, 3
    %v1010 = vrot.slane %v990, 3
    %v1011 = vrot.slane %v991, 3
    %v1012 = vsel %vm184, %v1010, %v1011
    %v1013 = vsel %vm184, %v1009, %v1010
    %v1014 = vsel %vm184, %v1008, %v1009
    %v1015 = vsel %vm184, %v1011, %v1008
    %v1016 = vrot.slane %v988, 4
    %v1017 = vrot.slane %v989, 4
    %v1018 = vrot.slane %v990, 4
    %v1019 = vrot.slane %v991, 4
    %v1020 = vsel %vm295, %v1018, %v1019
    %v1021 = vsel %vm295, %v1017, %v1018
    %v1022 = vsel %vm295, %v1016, %v1017
    %v1023 = vsel %vm295, %v1019, %v1016
    %1028 = vrot.lane.b32.xlu0 %v998, 32
    %v1029 = vpop.permute.xlu0 %1028
    %1030 = vrot.lane.b32.xlu0 %v997, 32
    %v1031 = vpop.permute.xlu0 %1030
    %1032 = vrot.lane.b32.xlu0 %v996, 32
    %v1033 = vpop.permute.xlu0 %1032
    %1034 = vrot.lane.b32.xlu0 %v999, 32
    %v1035 = vpop.permute.xlu0 %1034
    %1044 = vrot.lane.b32.xlu0 %v1006, 64
    %v1045 = vpop.permute.xlu0 %1044
    %1046 = vrot.lane.b32.xlu0 %v1005, 64
    %v1047 = vpop.permute.xlu0 %1046
    %1048 = vrot.lane.b32.xlu0 %v1004, 64
    %v1049 = vpop.permute.xlu0 %1048
    %1050 = vrot.lane.b32.xlu0 %v1007, 64
    %v1051 = vpop.permute.xlu0 %1050
    %1060 = vrot.lane.b32.xlu0 %v1014, 96
    %v1061 = vpop.permute.xlu0 %1060
    %1062 = vrot.lane.b32.xlu0 %v1013, 96
    %v1063 = vpop.permute.xlu0 %1062
    %1064 = vrot.lane.b32.xlu0 %v1012, 96
    %v1065 = vpop.permute.xlu0 %1064
    %1066 = vrot.lane.b32.xlu0 %v1015, 96
    %v1067 = vpop.permute.xlu0 %1066
    %v1072 = vsel %vm790, %v988, %v1029
    %v1073 = vsel %vm790, %v989, %v1031
    %v1074 = vsel %vm790, %v990, %v1033
    %v1075 = vsel %vm790, %v991, %v1035
    %v1076 = vsel %vm800, %v1072, %v1045
    %v1077 = vsel %vm800, %v1073, %v1047
    %v1078 = vsel %vm800, %v1074, %v1049
    %v1079 = vsel %vm800, %v1075, %v1051
    %vm1080 = vcmask 785408
    %v1081 = vsel %vm1080, %v1076, %v1061
    %v1082 = vsel %vm1080, %v1077, %v1063
    %v1083 = vsel %vm1080, %v1078, %v1065
    %v1084 = vsel %vm1080, %v1079, %v1067
    %v1085 = vld [vmem:[%s7] sm:$0xff]
    %v1086 = vld [vmem:[%s7 + $0x8] sm:$0xff]
    %v1087 = vld [vmem:[%s7 + $0x10] sm:$0xff]
    %v1088 = vld [vmem:[%s7 + $0x18] sm:$0xff]
    %v1089 = vld [vmem:[%s7 + $0x20] sm:$0xff]
    %v1090 = vld [vmem:[%s7 + $0x28] sm:$0xff]
    %v1091 = vld [vmem:[%s7 + $0x30] sm:$0xff]
    %v1092 = vld [vmem:[%s7 + $0x38] sm:$0xff]
    %v1093 = vld [vmem:[%s7 + $0x40] sm:$0xff]
    %v1094 = vld [vmem:[%s7 + $0x48] sm:$0xff]
    %v1095 = vld [vmem:[%s7 + $0x50] sm:$0xff]
    %v1096 = vld [vmem:[%s7 + $0x58] sm:$0xff]
    %v1097 = vld [vmem:[%s7 + $0x60] sm:$0xff]
    %v1098 = vld [vmem:[%s7 + $0x68] sm:$0xff]
    %v1099 = vld [vmem:[%s7 + $0x70] sm:$0xff]
    %v1100 = vld [vmem:[%s7 + $0x78] sm:$0xff]
    %v1101 = vld [vmem:[%s7 + $0x80] sm:$0xff]
    %v1102 = vld [vmem:[%s7 + $0x88] sm:$0xff]
    %v1103 = vld [vmem:[%s7 + $0x90] sm:$0xff]
    %v1104 = vld [vmem:[%s7 + $0x98] sm:$0xff]
    %v1106 = vsel %vm790, %v1022, 0
    %v1109 = vsel %vm790, %v1021, 0
    %v1112 = vsel %vm790, %v1020, 0
    %v1115 = vsel %vm790, %v1023, 0
    %1117 = vmatprep.subr.mxu0 0.0
    %1118 = vmatpush1.msra.mxu0 %v1100
    %1119 = vmatprep.subr.mxu0 0.0
    %1120 = vmatpush1.msra.mxu0 %v1099
    %1121 = vmatprep.subr.mxu0 0.0
    %1122 = vmatpush1.msra.mxu0 %v1098
    %1123 = vmatprep.subr.mxu0 0.0
    %1124 = vmatpush1.msra.mxu0 %v1097
    %1125 = vmatprep.subr.mxu0 0.0
    %1126 = vmatpush1.msra.mxu0 %v1096
    %1127 = vmatprep.subr.mxu0 0.0
    %1128 = vmatpush1.msra.mxu0 %v1095
    %1129 = vmatprep.subr.mxu0 0.0
    %1130 = vmatpush1.msra.mxu0 %v1094
    %1131 = vmatprep.subr.mxu0 0.0
    %1132 = vmatpush1.msra.mxu0 %v1093
    %1133 = vmatprep.subr.mxu0 0.0
    %1134 = vmatpush1.msra.mxu0 %v1092
    %1135 = vmatprep.subr.mxu0 0.0
    %1136 = vmatpush1.msra.mxu0 %v1091
    %1137 = vmatprep.subr.mxu0 0.0
    %1138 = vmatpush1.msra.mxu0 %v1090
    %1139 = vmatprep.subr.mxu0 0.0
    %1140 = vmatpush1.msra.mxu0 %v1089
    %1141 = vmatprep.subr.mxu0 0.0
    %1142 = vmatpush1.msra.mxu0 %v1088
    %1143 = vmatprep.subr.mxu0 0.0
    %1144 = vmatpush1.msra.mxu0 %v1087
    %1145 = vmatprep.subr.mxu0 0.0
    %1146 = vmatpush1.msra.mxu0 %v1086
    %1147 = vmatprep.subr.mxu0 0.0
    %1148 = vmatpush1.msra.mxu0 %v1085
    %1149 = vmatprep.subr.mxu0 0.0
    %1150 = vmatpush2.msra.mxu0 0.0
    %1151 = vmatprep.subr.mxu0 0.0
    %1152 = vmatpush2.msra.mxu0 0.0
    %1153 = vmatprep.subr.mxu0 0.0
    %1154 = vmatpush2.msra.mxu0 0.0
    %1155 = vmatprep.subr.mxu0 0.0
    %1156 = vmatpush2.msra.mxu0 0.0
    %1157 = vmatprep.subr.mxu0 0.0
    %1158 = vmatpush2.msra.mxu0 0.0
    %1159 = vmatprep.subr.mxu0 0.0
    %1160 = vmatpush2.msra.mxu0 0.0
    %1161 = vmatprep.subr.mxu0 0.0
    %1162 = vmatpush2.msra.mxu0 0.0
    %1163 = vmatprep.subr.mxu0 0.0
    %1164 = vmatpush2.msra.mxu0 0.0
    %1165 = vmatprep.subr.mxu0 0.0
    %1166 = vmatpush2.msra.mxu0 0.0
    %1167 = vmatprep.subr.mxu0 0.0
    %1168 = vmatpush2.msra.mxu0 0.0
    %1169 = vmatprep.subr.mxu0 0.0
    %1170 = vmatpush2.msra.mxu0 0.0
    %1171 = vmatprep.subr.mxu0 0.0
    %1172 = vmatpush2.msra.mxu0 0.0
    %1173 = vmatprep.subr.mxu0 0.0
    %1174 = vmatpush2.msra.mxu0 %v1104
    %1175 = vmatprep.subr.mxu0 0.0
    %1176 = vmatpush2.msra.mxu0 %v1103
    %1177 = vmatprep.subr.mxu0 0.0
    %1178 = vmatpush2.msra.mxu0 %v1102
    %1179 = vmatprep.subr.mxu0 0.0
    %1180 = vmatpush2.msra.mxu0 %v1101
    %1181 = vmatprep.mubr.f32.mxu0 %v1106
    %1182 = vmatmul.mubr.f32.gmra.mxu0 %v1081
    %v1183 = vpop.f32.mrf.mxu0
    %v1184 = vadd.f32 0.0, %v1183
    %v1185 = vpop.f32.mrf.mxu0
    %1186 = vmatprep.mubr.f32.mxu0 %v1109
    %1187 = vmatmul.mubr.f32.gmra.mxu0 %v1082
    %v1188 = vpop.f32.mrf.mxu0
    %v1189 = vadd.f32 0.0, %v1188
    %v1190 = vpop.f32.mrf.mxu0
    %1191 = vmatprep.mubr.f32.mxu0 %v1112
    %1192 = vmatmul.mubr.f32.gmra.mxu0 %v1083
    %v1193 = vpop.f32.mrf.mxu0
    %v1194 = vadd.f32 0.0, %v1193
    %v1195 = vpop.f32.mrf.mxu0
    %1196 = vmatprep.mubr.f32.mxu0 %v1115
    %1197 = vmatmul.mubr.f32.gmra.mxu0 %v1084
    %v1198 = vpop.f32.mrf.mxu0
    %v1199 = vadd.f32 0.0, %v1198
    %v1200 = vpop.f32.mrf.mxu0
    %1201 = vdwg.mxu0
    %vm1202 = vcmp.lt.s32.totalorder %v47, 4
    %vm1203 = vcmp.lt.s32.totalorder %v48, 4
    %vm1204 = vcmp.lt.s32.totalorder %v49, 4
    %vm1205 = vcmp.lt.s32.totalorder %v50, 4
    %v1206 = vsel %vm1202, 1, 0
    %v1207 = vsel %vm1203, 1, 0
    %v1208 = vsel %vm1204, 1, 0
    %v1209 = vsel %vm1205, 1, 0
    %v1210 = vcvt.s32.f32 %v1206
    %v1211 = vcvt.s32.f32 %v1207
    %v1212 = vcvt.s32.f32 %v1208
    %v1213 = vcvt.s32.f32 %v1209
    %v1214 = vmul.f32 %v1184, %v1210
    %v1215 = vmul.f32 %v1189, %v1211
    %v1216 = vmul.f32 %v1194, %v1212
    %v1217 = vmul.f32 %v1199, %v1213
    %v1218 = vsel %vm790, %v1214, 0.0
    %v1219 = vsel %vm790, %v1215, 0.0
    %v1220 = vadd.f32 %v1218, %v1219
    %v1221 = vsel %vm790, %v1216, 0.0
    %v1222 = vadd.f32 %v1220, %v1221
    %v1223 = vsel %vm790, %v1217, 0.0
    %v1224 = vadd.f32 %v1222, %v1223
    %v1225 = vrot.slane %v1224, 4
    %v1226 = vadd.f32 %v1224, %v1225
    %v1227 = vrot.slane %v1226, 2
    %v1228 = vadd.f32 %v1226, %v1227
    %v1229 = vrot.slane %v1228, 1
    %v1230 = vadd.f32 %v1228, %v1229
    %v1231 = vmul.f32 %v1230, 0.125
    %v1232 = vmul.f32 %v1214, %v1184
    %v1233 = vmul.f32 %v1215, %v1189
    %v1234 = vmul.f32 %v1216, %v1194
    %v1235 = vmul.f32 %v1217, %v1199
    %v1236 = vsel %vm790, %v1232, 0.0
    %v1237 = vsel %vm790, %v1233, 0.0
    %v1238 = vadd.f32 %v1236, %v1237
    %v1239 = vsel %vm790, %v1234, 0.0
    %v1240 = vadd.f32 %v1238, %v1239
    %v1241 = vsel %vm790, %v1235, 0.0
    %v1242 = vadd.f32 %v1240, %v1241
    %v1243 = vrot.slane %v1242, 4
    %v1244 = vadd.f32 %v1242, %v1243
    %v1245 = vrot.slane %v1244, 2
    %v1246 = vadd.f32 %v1244, %v1245
    %v1247 = vrot.slane %v1246, 1
    %v1248 = vadd.f32 %v1246, %v1247
    %v1249 = vmul.f32 %v1248, 0.125
    %v1250 = vmul.f32 %v1231, %v1231
    %v1251 = vsub.f32 %v1249, %v1250
    %v1252 = vadd.f32 %v1251, 1e-05
    %v1253 = vrsqrt.pop %v1252
    %v1254 = vld [vmem:[%s8] sm:$0x1]
    %v1255 = vmul.f32 %v1253, %v1254
    %v1256 = vld [vmem:[%s9] sm:$0x1]
    %v1257 = vmul.f32 %v1231, %v1255
    %v1258 = vsub.f32 %v1256, %v1257
    %v1259 = vlaneseq
    %v1260 = vshrl.u32 %v1259, 7
    %v1261 = vsub.s32 0, %v1260
    %v1262 = vrot.slane %v1255, %v1261
    %v1263 = vmul.f32 %v1184, %v1262
    %v1264 = vmul.f32 %v1189, %v1262
    %v1265 = vmul.f32 %v1194, %v1262
    %v1266 = vmul.f32 %v1199, %v1262
    %v1268 = vlaneseq
    %v1269 = vshrl.u32 %v1268, 7
    %v1270 = vsub.s32 0, %v1269
    %v1271 = vrot.slane %v1258, %v1270
    %v1273 = vadd.f32 %v1263, %v1271
    %v1274 = vadd.f32 %v1264, %v1271
    %v1275 = vadd.f32 %v1265, %v1271
    %v1276 = vadd.f32 %v1266, %v1271
    %v1277 = vmax.f32 %v1273, 0.0
    %v1278 = vmax.f32 %v1274, 0.0
    %v1279 = vmax.f32 %v1275, 0.0
    %v1280 = vmax.f32 %v1276, 0.0
    %v1281 = vrot.slane %v1277, 1
    %v1282 = vrot.slane %v1278, 1
    %v1283 = vrot.slane %v1279, 1
    %v1284 = vrot.slane %v1280, 1
    %v1285 = vsel %vm60, %v1283, %v1284
    %v1286 = vsel %vm60, %v1282, %v1283
    %v1287 = vsel %vm60, %v1281, %v1282
    %v1288 = vsel %vm60, %v1284, %v1281
    %v1289 = vrot.slane %v1277, 2
    %v1290 = vrot.slane %v1278, 2
    %v1291 = vrot.slane %v1279, 2
    %v1292 = vrot.slane %v1280, 2
    %v1293 = vsel %vm173, %v1291, %v1292
    %v1294 = vsel %vm173, %v1290, %v1291
    %v1295 = vsel %vm173, %v1289, %v1290
    %v1296 = vsel %vm173, %v1292, %v1289
    %v1297 = vrot.slane %v1277, 3
    %v1298 = vrot.slane %v1278, 3
    %v1299 = vrot.slane %v1279, 3
    %v1300 = vrot.slane %v1280, 3
    %v1301 = vsel %vm184, %v1299, %v1300
    %v1302 = vsel %vm184, %v1298, %v1299
    %v1303 = vsel %vm184, %v1297, %v1298
    %v1304 = vsel %vm184, %v1300, %v1297
    %1309 = vrot.lane.b32.xlu0 %v1287, 32
    %v1310 = vpop.permute.xlu0 %1309
    %1311 = vrot.lane.b32.xlu0 %v1286, 32
    %v1312 = vpop.permute.xlu0 %1311
    %1313 = vrot.lane.b32.xlu0 %v1285, 32
    %v1314 = vpop.permute.xlu0 %1313
    %1315 = vrot.lane.b32.xlu0 %v1288, 32
    %v1316 = vpop.permute.xlu0 %1315
    %1325 = vrot.lane.b32.xlu0 %v1295, 64
    %v1326 = vpop.permute.xlu0 %1325
    %1327 = vrot.lane.b32.xlu0 %v1294, 64
    %v1328 = vpop.permute.xlu0 %1327
    %1329 = vrot.lane.b32.xlu0 %v1293, 64
    %v1330 = vpop.permute.xlu0 %1329
    %1331 = vrot.lane.b32.xlu0 %v1296, 64
    %v1332 = vpop.permute.xlu0 %1331
    %1341 = vrot.lane.b32.xlu0 %v1303, 96
    %v1342 = vpop.permute.xlu0 %1341
    %1343 = vrot.lane.b32.xlu0 %v1302, 96
    %v1344 = vpop.permute.xlu0 %1343
    %1345 = vrot.lane.b32.xlu0 %v1301, 96
    %v1346 = vpop.permute.xlu0 %1345
    %1347 = vrot.lane.b32.xlu0 %v1304, 96
    %v1348 = vpop.permute.xlu0 %1347
    %v1353 = vsel %vm790, %v1277, %v1310
    %v1354 = vsel %vm790, %v1278, %v1312
    %v1355 = vsel %vm790, %v1279, %v1314
    %v1356 = vsel %vm790, %v1280, %v1316
    %v1357 = vsel %vm800, %v1353, %v1326
    %v1358 = vsel %vm800, %v1354, %v1328
    %v1359 = vsel %vm800, %v1355, %v1330
    %v1360 = vsel %vm800, %v1356, %v1332
    %v1361 = vsel %vm1080, %v1357, %v1342
    %v1362 = vsel %vm1080, %v1358, %v1344
    %v1363 = vsel %vm1080, %v1359, %v1346
    %v1364 = vsel %vm1080, %v1360, %v1348
    %v1365 = vlaneseq
    %v1366 = vand.u32 %v1365, 127
    %v1367 = vmul.u32 %v43, 16
    %vm1368 = vcmp.eq.s32.totalorder %v1366, %v1367
    %v1369 = vsel %vm1368, 1, 0
    %v1370 = vcvt.s32.f32 %v1369
    %v1372 = vsel %vm790, %v1370, 0
    %1374 = vmatprep.subr.mxu0 0.0
    %1375 = vmatpush1.msra.mxu0 0.0
    %1376 = vmatprep.subr.mxu0 0.0
    %1377 = vmatpush1.msra.mxu0 0.0
    %1378 = vmatprep.subr.mxu0 0.0
    %1379 = vmatpush1.msra.mxu0 0.0
    %1380 = vmatprep.subr.mxu0 0.0
    %1381 = vmatpush1.msra.mxu0 0.0
    %1382 = vmatprep.subr.mxu0 0.0
    %1383 = vmatpush1.msra.mxu0 0.0
    %1384 = vmatprep.subr.mxu0 0.0
    %1385 = vmatpush1.msra.mxu0 0.0
    %1386 = vmatprep.subr.mxu0 0.0
    %1387 = vmatpush1.msra.mxu0 0.0
    %1388 = vmatprep.subr.mxu0 0.0
    %1389 = vmatpush1.msra.mxu0 0.0
    %1390 = vmatprep.subr.mxu0 0.0
    %1391 = vmatpush1.msra.mxu0 0.0
    %1392 = vmatprep.subr.mxu0 0.0
    %1393 = vmatpush1.msra.mxu0 0.0
    %1394 = vmatprep.subr.mxu0 0.0
    %1395 = vmatpush1.msra.mxu0 0.0
    %1396 = vmatprep.subr.mxu0 0.0
    %1397 = vmatpush1.msra.mxu0 0.0
    %1398 = vmatprep.subr.mxu0 0.0
    %1399 = vmatpush1.msra.mxu0 %v1364
    %1400 = vmatprep.subr.mxu0 0.0
    %1401 = vmatpush1.msra.mxu0 %v1363
    %1402 = vmatprep.subr.mxu0 0.0
    %1403 = vmatpush1.msra.mxu0 %v1362
    %1404 = vmatprep.subr.mxu0 0.0
    %1405 = vmatpush1.msra.mxu0 %v1361
    %1406 = vmatprep.subr.mxu0 0.0
    %1407 = vmatpush2.msra.mxu0 0.0
    %1408 = vmatprep.subr.mxu0 0.0
    %1409 = vmatpush2.msra.mxu0 0.0
    %1410 = vmatprep.subr.mxu0 0.0
    %1411 = vmatpush2.msra.mxu0 0.0
    %1412 = vmatprep.subr.mxu0 0.0
    %1413 = vmatpush2.msra.mxu0 0.0
    %1414 = vmatprep.subr.mxu0 0.0
    %1415 = vmatpush2.msra.mxu0 0.0
    %1416 = vmatprep.subr.mxu0 0.0
    %1417 = vmatpush2.msra.mxu0 0.0
    %1418 = vmatprep.subr.mxu0 0.0
    %1419 = vmatpush2.msra.mxu0 0.0
    %1420 = vmatprep.subr.mxu0 0.0
    %1421 = vmatpush2.msra.mxu0 0.0
    %1422 = vmatprep.subr.mxu0 0.0
    %1423 = vmatpush2.msra.mxu0 0.0
    %1424 = vmatprep.subr.mxu0 0.0
    %1425 = vmatpush2.msra.mxu0 0.0
    %1426 = vmatprep.subr.mxu0 0.0
    %1427 = vmatpush2.msra.mxu0 0.0
    %1428 = vmatprep.subr.mxu0 0.0
    %1429 = vmatpush2.msra.mxu0 0.0
    %1430 = vmatprep.subr.mxu0 0.0
    %1431 = vmatpush2.msra.mxu0 0.0
    %1432 = vmatprep.subr.mxu0 0.0
    %1433 = vmatpush2.msra.mxu0 0.0
    %1434 = vmatprep.subr.mxu0 0.0
    %1435 = vmatpush2.msra.mxu0 0.0
    %1436 = vmatprep.subr.mxu0 0.0
    %1437 = vmatpush2.msra.mxu0 0.0
    %1438 = vmatprep.mubr.f32.mxu0 0.0
    %1439 = vmatmul.mubr.f32.gmra.mxu0 %v1372
    %v1440 = vpop.f32.mrf.mxu0
    %v1441 = vadd.f32 0.0, %v1440
    %v1442 = vpop.f32.mrf.mxu0
    %1443 = vdwg.mxu0
    %v1444 = vld [vmem:[%s10] sm:$0xff]
    %v1445 = vld [vmem:[%s10 + $0x8] sm:$0xff]
    %v1446 = vld [vmem:[%s10 + $0x10] sm:$0xff]
    %v1447 = vld [vmem:[%s10 + $0x18] sm:$0xff]
    %v1448 = vld [vmem:[%s10 + $0x20] sm:$0xff]
    %v1449 = vld [vmem:[%s10 + $0x28] sm:$0xff]
    %v1450 = vld [vmem:[%s10 + $0x30] sm:$0xff]
    %v1451 = vld [vmem:[%s10 + $0x38] sm:$0xff]
    %v1452 = vld [vmem:[%s10 + $0x40] sm:$0xff]
    %v1453 = vld [vmem:[%s10 + $0x48] sm:$0xff]
    %v1454 = vld [vmem:[%s10 + $0x50] sm:$0xff]
    %v1455 = vld [vmem:[%s10 + $0x58] sm:$0xff]
    %v1456 = vld [vmem:[%s10 + $0x60] sm:$0xff]
    %v1457 = vld [vmem:[%s10 + $0x68] sm:$0xff]
    %v1458 = vld [vmem:[%s10 + $0x70] sm:$0xff]
    %v1459 = vld [vmem:[%s10 + $0x78] sm:$0xff]
    %v1460 = vld [vmem:[%s11] sm:$0x1]
    %v1462 = vlaneseq
    %v1463 = vshrl.u32 %v1462, 7
    %v1464 = vsub.s32 0, %v1463
    %v1465 = vrot.slane %v1460, %v1464
    %1467 = vmatprep.subr.mxu0 0.0
    %1468 = vmatpush1.msra.mxu0 %v1459
    %1469 = vmatprep.subr.mxu0 0.0
    %1470 = vmatpush1.msra.mxu0 %v1458
    %1471 = vmatprep.subr.mxu0 0.0
    %1472 = vmatpush1.msra.mxu0 %v1457
    %1473 = vmatprep.subr.mxu0 0.0
    %1474 = vmatpush1.msra.mxu0 %v1456
    %1475 = vmatprep.subr.mxu0 0.0
    %1476 = vmatpush1.msra.mxu0 %v1455
    %1477 = vmatprep.subr.mxu0 0.0
    %1478 = vmatpush1.msra.mxu0 %v1454
    %1479 = vmatprep.subr.mxu0 0.0
    %1480 = vmatpush1.msra.mxu0 %v1453
    %1481 = vmatprep.subr.mxu0 0.0
    %1482 = vmatpush1.msra.mxu0 %v1452
    %1483 = vmatprep.subr.mxu0 0.0
    %1484 = vmatpush1.msra.mxu0 %v1451
    %1485 = vmatprep.subr.mxu0 0.0
    %1486 = vmatpush1.msra.mxu0 %v1450
    %1487 = vmatprep.subr.mxu0 0.0
    %1488 = vmatpush1.msra.mxu0 %v1449
    %1489 = vmatprep.subr.mxu0 0.0
    %1490 = vmatpush1.msra.mxu0 %v1448
    %1491 = vmatprep.subr.mxu0 0.0
    %1492 = vmatpush1.msra.mxu0 %v1447
    %1493 = vmatprep.subr.mxu0 0.0
    %1494 = vmatpush1.msra.mxu0 %v1446
    %1495 = vmatprep.subr.mxu0 0.0
    %1496 = vmatpush1.msra.mxu0 %v1445
    %1497 = vmatprep.subr.mxu0 0.0
    %1498 = vmatpush1.msra.mxu0 %v1444
    %1499 = vmatprep.subr.mxu0 0.0
    %1500 = vmatpush2.msra.mxu0 0.0
    %1501 = vmatprep.subr.mxu0 0.0
    %1502 = vmatpush2.msra.mxu0 0.0
    %1503 = vmatprep.subr.mxu0 0.0
    %1504 = vmatpush2.msra.mxu0 0.0
    %1505 = vmatprep.subr.mxu0 0.0
    %1506 = vmatpush2.msra.mxu0 0.0
    %1507 = vmatprep.subr.mxu0 0.0
    %1508 = vmatpush2.msra.mxu0 0.0
    %1509 = vmatprep.subr.mxu0 0.0
    %1510 = vmatpush2.msra.mxu0 0.0
    %1511 = vmatprep.subr.mxu0 0.0
    %1512 = vmatpush2.msra.mxu0 0.0
    %1513 = vmatprep.subr.mxu0 0.0
    %1514 = vmatpush2.msra.mxu0 0.0
    %1515 = vmatprep.subr.mxu0 0.0
    %1516 = vmatpush2.msra.mxu0 0.0
    %1517 = vmatprep.subr.mxu0 0.0
    %1518 = vmatpush2.msra.mxu0 0.0
    %1519 = vmatprep.subr.mxu0 0.0
    %1520 = vmatpush2.msra.mxu0 0.0
    %1521 = vmatprep.subr.mxu0 0.0
    %1522 = vmatpush2.msra.mxu0 0.0
    %1523 = vmatprep.subr.mxu0 0.0
    %1524 = vmatpush2.msra.mxu0 0.0
    %1525 = vmatprep.subr.mxu0 0.0
    %1526 = vmatpush2.msra.mxu0 0.0
    %1527 = vmatprep.subr.mxu0 0.0
    %1528 = vmatpush2.msra.mxu0 0.0
    %1529 = vmatprep.subr.mxu0 0.0
    %1530 = vmatpush2.msra.mxu0 0.0
    %1531 = vmatprep.mubr.f32.mxu0 0.0
    %1532 = vmatmul.mubr.f32.gmra.mxu0 %v1441
    %v1533 = vpop.f32.mrf.mxu0
    %v1534 = vadd.f32 %v1465, %v1533
    %v1535 = vpop.f32.mrf.mxu0
    %1536 = vdwg.mxu0
    %1537 = vst [vmem:[#allocation2] sm:$0xff] %v1534
    // Predicated region
    $region50: #{tpu_custom_call.1} parent=1 // pred_check
      _
    $region51: #{tpu_custom_call.1} parent=1 // pred_check_branch
      %1539 = sbr.rel (0) target = $region53
    $region52: #{tpu_custom_call.1} parent=1 // pred_region
      %s1541 = ssub.s32 128, 128
      %1542 = vsyncadd [#allocation3], %s1541
      %s1544 = sshll.u32 [#allocation2], 4
      %s1545 = int_to_ptr.vmem [resolvable:$true] %s1544
      %1547 = dma.vmem_to_hbm [thread:$0]  %s1545, 128, %s12, [#allocation3]
    $region53: #{tpu_custom_call.1} parent=1 // pred_fallthru
      _
    // Predicated region
    $region54: #{tpu_custom_call.1} parent=1 // pred_check
      _
    $region55: #{tpu_custom_call.1} parent=1 // pred_check_branch
      %1549 = sbr.rel (0) target = $region57
    $region56: #{tpu_custom_call.1} parent=1 // pred_region
      %1550 = dma.done [#allocation3], 128
    $region57: #{tpu_custom_call.1} parent=1 // pred_fallthru
      _
    %1551 = vsyncpa [#allocation3], 1

</llo_original>
